<compile_context>
chip_gen: v7x
topology: tpu7x:2x2x1
jax: 0.10.0
libtpu: 0.0.40
codegen_flags: <defaults>
</compile_context>

<pallas_src>
import functools

import jax
import jax.numpy as jnp
from jax.experimental import pallas as pl
from jax.experimental.pallas import tpu as pltpu

COMPUTE_DTYPE = jnp.bfloat16   # HBM I/O + MXU operand dtype; accumulation is f32


# ----------------------------------------------------------------------------
# Pallas kernel: the whole RepDark block for one (batch, row-tile) grid cell.
# ----------------------------------------------------------------------------
def _make_repdark_kernel(th, W, Cin, Ch, Cout):
    """th: output rows per tile, W: width, Cin==Cout: io channels, Ch: hidden."""

    def kernel(x_ref, top_ref, bot_ref, w3_ref, b3_ref, w2_ref, b2_ref,
               o_ref, xpad_ref):
        # x_ref   : (th, W, Cin)      bf16  current row tile (batch dim squeezed)
        # top_ref : (1, W, Cin)       bf16  row above the tile (clamped at top)
        # bot_ref : (1, W, Cin)       bf16  row below the tile (clamped at bottom)
        # w3_ref  : (9*Cin, Ch)       bf16  reparameterised 3x3 weight (BN folded)
        # b3_ref  : (1, Ch)           f32
        # w2_ref  : (Ch, Cout)        bf16  cv2 1x1 weight (BN folded)
        # b2_ref  : (1, Cout)         f32
        # o_ref   : (th, W, Cout)     bf16
        # xpad_ref: (th+2, W+2, Cin)  bf16  VMEM scratch: zero-padded halo window
        r = pl.program_id(1)
        nr = pl.num_programs(1)

        # ---- assemble the zero-padded (th+2, W+2, Cin) window in VMEM --------
        zero_row = jnp.zeros((1, W, Cin), COMPUTE_DTYPE)
        top = jnp.where(r > 0, top_ref[...], zero_row)        # image top edge -> 0
        bot = jnp.where(r < nr - 1, bot_ref[...], zero_row)   # image bottom  -> 0
        zcol = jnp.zeros((th + 2, 1, Cin), COMPUTE_DTYPE)
        xpad_ref[:, pl.ds(0, 1), :] = zcol                    # left padding col
        xpad_ref[:, pl.ds(W + 1, 1), :] = zcol                # right padding col
        xpad_ref[pl.ds(0, 1), pl.ds(1, W), :] = top
        xpad_ref[pl.ds(th + 1, 1), pl.ds(1, W), :] = bot
        xpad_ref[pl.ds(1, th), pl.ds(1, W), :] = x_ref[...]

        # ---- cv1 (RepConv folded to one 3x3): single big-K im2col matmul -----
        # tap index = kh*3 + kw, matching w3_ref's (kh, kw, Cin)-major row order.
        taps = [xpad_ref[pl.ds(dh, th), pl.ds(dw, W), :]
                for dh in range(3) for dw in range(3)]        # 9 x (th, W, Cin)
        patch = jnp.concatenate(taps, axis=-1).reshape(th * W, 9 * Cin)
        y = jnp.dot(patch, w3_ref[...], preferred_element_type=jnp.float32)
        y = y + b3_ref[...]
        y = y * jax.nn.sigmoid(y)                             # SiLU (EUP)

        # ---- cv2 (1x1 conv) + SiLU, fused -------------------------------------
        z = jnp.dot(y.astype(COMPUTE_DTYPE), w2_ref[...],
                    preferred_element_type=jnp.float32) + b2_ref[...]
        z = z * jax.nn.sigmoid(z)                             # SiLU

        # ---- residual: taps[4] is the un-shifted centre == this tile's input --
        res = taps[4].reshape(th * W, Cin).astype(jnp.float32) + z
        o_ref[...] = res.reshape(th, W, Cout).astype(o_ref.dtype)

    return kernel


# ----------------------------------------------------------------------------
# Row-tile picker: big tiles (M = th*W up to 4096, prefer multiples of 256),
# bounded by a VMEM budget so the working set fits v5e/v6e/v7x scoped VMEM.
# ----------------------------------------------------------------------------
def _pick_row_tile(H, W, cin, ch, cout, vmem_budget=18 << 20, max_m=4096):
    per_row = ((W + 2) * cin * 2            # padded halo window (bf16)
               + W * (9 * cin * 2           # im2col patch (bf16)
                      + ch * (4 + 2)        # f32 hidden act + bf16 recast
                      + cout * (4 + 4 + 2)  # f32 z, f32 residual, bf16 out
                      + cin * 2 * 2))       # double-buffered input block
    th_cap = max(1, min(H, vmem_budget // max(per_row, 1), max_m // max(W, 1)))
    cands = [t for t in range(1, H + 1) if H % t == 0 and t <= th_cap] or [1]
    return max(cands, key=lambda t: ((t * W) % 256 == 0, t))


# ----------------------------------------------------------------------------
# Forward wrapper (NHWC bf16 in / NHWC bf16 out; no pad / transpose in HBM)
# ----------------------------------------------------------------------------
@functools.partial(jax.jit, static_argnames=("row_tile",))
def repdark_forward(x, w_rep, b_rep, w_cv2, b_cv2, *, row_tile=None):
    """RepDark forward.  x: (N, H, W, Cin) NHWC bfloat16; returns NHWC bfloat16."""
    N, H, W, Cin = x.shape
    K9, Ch = w_rep.shape
    _, Cout = w_cv2.shape
    assert K9 == 9 * Cin
    assert Cout == Cin, "residual x + cv2(cv1(x)) requires out_channels == in_channels"

    th = row_tile if row_tile is not None else _pick_row_tile(H, W, Cin, Ch, Cout)
    assert H % th == 0, (H, th)
    grid = (N, H // th)

    kernel = _make_repdark_kernel(th, W, Cin, Ch, Cout)
    out = pl.pallas_call(
        kernel,
        out_shape=jax.ShapeDtypeStruct((N, H, W, Cout), COMPUTE_DTYPE),
        grid=grid,
        in_specs=[
            # main row tile (non-overlapping, auto-pipelined)
            pl.BlockSpec((None, th, W, Cin), lambda n, r: (n, r, 0, 0)),
            # 1-row halo above / below (block size 1 => index is the row index,
            # clamped at the image edge; the kernel masks the edge rows to zero)
            pl.BlockSpec((None, 1, W, Cin),
                         lambda n, r: (n, jnp.maximum(r * th - 1, 0), 0, 0)),
            pl.BlockSpec((None, 1, W, Cin),
                         lambda n, r: (n, jnp.minimum(r * th + th, H - 1), 0, 0)),
            # weights / biases: resident across the grid
            pl.BlockSpec((9 * Cin, Ch), lambda n, r: (0, 0)),
            pl.BlockSpec((1, Ch), lambda n, r: (0, 0)),
            pl.BlockSpec((Ch, Cout), lambda n, r: (0, 0)),
            pl.BlockSpec((1, Cout), lambda n, r: (0, 0)),
        ],
        out_specs=pl.BlockSpec((None, th, W, Cout), lambda n, r: (n, r, 0, 0)),
        scratch_shapes=[pltpu.VMEM((th + 2, W + 2, Cin), COMPUTE_DTYPE)],
        compiler_params=pltpu.CompilerParams(
            dimension_semantics=("parallel", "parallel"),
            vmem_limit_bytes=32 * 1024 * 1024),
    )(x, x, x, w_rep, b_rep.reshape(1, Ch), w_cv2, b_cv2.reshape(1, Cout))
    return out


# ----------------------------------------------------------------------------
# Parameter construction (deterministic, synthetic), BN folding + RepConv reparam
# ----------------------------------------------------------------------------
def _fold_bn(w_oihw, gamma, beta, mean, var, eps=1e-5):
    """Fold eval-mode BatchNorm into conv weight (O,I,kh,kw) and bias."""
    scale = gamma / jnp.sqrt(var + eps)
    return w_oihw * scale[:, None, None, None], beta - mean * scale


def _bn_stats(key, c):
    k1, k2, k3, k4 = jax.random.split(key, 4)
    gamma = jax.random.uniform(k1, (c,), jnp.float32, 0.5, 1.5)
    beta = jax.random.normal(k2, (c,), jnp.float32) * 0.1
    mean = jax.random.normal(k3, (c,), jnp.float32) * 0.1
    var = jax.random.uniform(k4, (c,), jnp.float32, 0.5, 1.5)
    return gamma, beta, mean, var


def make_repdark_params(key, in_channels, out_channels, ratio=0.5):
    """Synthetic RepDark weights with BN folded and RepConv reparameterised."""
    h = int(in_channels * ratio)
    ks = jax.random.split(key, 6)

    # cv1 = RepConv(in, h, 3): 3x3 branch + 1x1 branch, each Conv+BN (no act)
    w3 = jax.random.normal(ks[0], (h, in_channels, 3, 3), jnp.float32) * 0.1
    w3_f, b3_f = _fold_bn(w3, *_bn_stats(ks[1], h))
    w1 = jax.random.normal(ks[2], (h, in_channels, 1, 1), jnp.float32) * 0.1
    w1_f, b1_f = _fold_bn(w1, *_bn_stats(ks[3], h))
    # Reparameterise: add the 1x1 branch into the centre tap of the 3x3 kernel.
    w_rep = w3_f.at[:, :, 1, 1].add(w1_f[:, :, 0, 0])
    b_rep = b3_f + b1_f
    # Big-K matmul layout: (kh, kw, Cin, h) -> (9*Cin, h), row = (kh*3+kw)*Cin + c.
    w_rep_mm = w_rep.transpose(2, 3, 1, 0).reshape(9 * in_channels, h)

    # cv2 = Conv(h, out, 1): Conv + BN + SiLU
    wc = jax.random.normal(ks[4], (out_channels, h, 1, 1), jnp.float32) * 0.1
    wc_f, bc_f = _fold_bn(wc, *_bn_stats(ks[5], out_channels))
    w_cv2_mm = wc_f[:, :, 0, 0].transpose(1, 0)             # (h, out)

    return {
        "w_rep": w_rep_mm.astype(COMPUTE_DTYPE),
        "b_rep": b_rep,                                     # f32
        "w_cv2": w_cv2_mm.astype(COMPUTE_DTYPE),
        "b_cv2": bc_f,                                      # f32
    }


# ----------------------------------------------------------------------------
# Pure-JAX reference (no Pallas) using the same folded weights, NHWC, f32 math
# ----------------------------------------------------------------------------
def repdark_reference(x_nhwc, w_rep, b_rep, w_cv2, b_cv2):
    N, H, W, Cin = x_nhwc.shape
    Ch = w_rep.shape[-1]
    w3 = w_rep.astype(jnp.float32).reshape(9, Cin, Ch)
    w2 = w_cv2.astype(jnp.float32)
    x = x_nhwc.astype(jnp.float32)
    xp = jnp.pad(x, ((0, 0), (1, 1), (1, 1), (0, 0)))
    acc = jnp.zeros((N, H, W, Ch), jnp.float32)
    for tap in range(9):
        dh, dw = tap // 3, tap % 3
        acc = acc + jnp.einsum("nhwc,cd->nhwd",
                               xp[:, dh:dh + H, dw:dw + W, :], w3[tap])
    y = acc + b_rep
    y = y * jax.nn.sigmoid(y)
    z = jnp.einsum("nhwc,cd->nhwd", y, w2) + b_cv2
    z = z * jax.nn.sigmoid(z)
    return x + z


# ----------------------------------------------------------------------------
if __name__ == "__main__":
    root = jax.random.PRNGKey(0)

    def run_case(case_id, n, c, h, w, row_tile):
        kx, kp = jax.random.split(jax.random.fold_in(root, case_id))
        x = jax.random.normal(kx, (n, h, w, c), jnp.float32).astype(COMPUTE_DTYPE)
        p = make_repdark_params(kp, in_channels=c, out_channels=c, ratio=0.5)
        y = repdark_forward(x, p["w_rep"], p["b_rep"], p["w_cv2"], p["b_cv2"],
                            row_tile=row_tile)
        y = jax.block_until_ready(y)
        assert y.shape == (n, h, w, c), y.shape
        yf = y.astype(jnp.float32)
        assert bool(jnp.all(jnp.isfinite(yf)))
        y_ref = repdark_reference(x, p["w_rep"], p["b_rep"], p["w_cv2"], p["b_cv2"])
        err = float(jnp.max(jnp.abs(yf - y_ref)))
        assert err < 2e-1, f"case {case_id}: max abs error vs reference = {err}"

    # Small smoke test; row_tile=8 forces 2 row tiles so both halo edges and an
    # interior halo fetch are exercised.
    run_case(0, n=2, c=16, h=16, w=16, row_tile=8)
    # Realistic channel count (dense 128-lane regime) with 4 row tiles.
    run_case(1, n=1, c=128, h=64, w=32, row_tile=16)

    print("KERNEL_OK")
</pallas_src>

<mosaic_0001>
module attributes {stable_mosaic.version = 11 : i64} {
  func.func @kernel(%arg0: i32, %arg1: i32, %arg2: memref<1x8x16x16xbf16, #tpu.memory_space<vmem>>, %arg3: memref<1x1x16x16xbf16, #tpu.memory_space<vmem>>, %arg4: memref<1x1x16x16xbf16, #tpu.memory_space<vmem>>, %arg5: memref<144x8xbf16, #tpu.memory_space<vmem>>, %arg6: memref<1x8xf32, #tpu.memory_space<vmem>>, %arg7: memref<8x16xbf16, #tpu.memory_space<vmem>>, %arg8: memref<1x16xf32, #tpu.memory_space<vmem>>, %arg9: memref<1x8x16x16xbf16, #tpu.memory_space<vmem>>, %arg10: memref<10x18x16xbf16, #tpu.memory_space<vmem>>) attributes {dimension_semantics = [#tpu.dimension_semantics<parallel>, #tpu.dimension_semantics<parallel>], iteration_bounds = array<i64: 2, 2>, scalar_prefetch = 0 : i64, scratch_operands = 1 : i64, tpu.core_type = #tpu.core_type<tc>, window_params = [{transform_indices = @transform_0, window_bounds = array<i64: 1, 8, 16, 16>}, {transform_indices = @transform_1, window_bounds = array<i64: 1, 1, 16, 16>}, {transform_indices = @transform_2, window_bounds = array<i64: 1, 1, 16, 16>}, {pipeline_mode = #tpu.pipeline_mode<synchronous>, transform_indices = @transform_3, window_bounds = array<i64: 144, 8>}, {pipeline_mode = #tpu.pipeline_mode<synchronous>, transform_indices = @transform_4, window_bounds = array<i64: 1, 8>}, {pipeline_mode = #tpu.pipeline_mode<synchronous>, transform_indices = @transform_5, window_bounds = array<i64: 8, 16>}, {pipeline_mode = #tpu.pipeline_mode<synchronous>, transform_indices = @transform_6, window_bounds = array<i64: 1, 16>}, {transform_indices = @transform_7, window_bounds = array<i64: 1, 8, 16, 16>}]} {
    %cst = arith.constant 0.000000e+00 : bf16
    %0 = vector.broadcast %cst : bf16 to vector<1x16x16xbf16>
    %c0_i32 = arith.constant 0 : i32
    %1 = arith.cmpi sgt, %arg1, %c0_i32 : i32
    %c0 = arith.constant 0 : index
    %c0_0 = arith.constant 0 : index
    %c0_1 = arith.constant 0 : index
    %c0_2 = arith.constant 0 : index
    %2 = vector.load %arg3[%c0, %c0_0, %c0_1, %c0_2] : memref<1x1x16x16xbf16, #tpu.memory_space<vmem>>, vector<1x1x16x16xbf16>
    %3 = vector.shape_cast %2 : vector<1x1x16x16xbf16> to vector<1x16x16xbf16>
    %4 = arith.select %1, %3, %0 : vector<1x16x16xbf16>
    %c1_i32 = arith.constant 1 : i32
    %5 = arith.cmpi slt, %arg1, %c1_i32 : i32
    %c0_3 = arith.constant 0 : index
    %c0_4 = arith.constant 0 : index
    %c0_5 = arith.constant 0 : index
    %c0_6 = arith.constant 0 : index
    %6 = vector.load %arg4[%c0_3, %c0_4, %c0_5, %c0_6] : memref<1x1x16x16xbf16, #tpu.memory_space<vmem>>, vector<1x1x16x16xbf16>
    %7 = vector.shape_cast %6 : vector<1x1x16x16xbf16> to vector<1x16x16xbf16>
    %8 = arith.select %5, %7, %0 : vector<1x16x16xbf16>
    %cst_7 = arith.constant 0.000000e+00 : bf16
    %9 = vector.broadcast %cst_7 : bf16 to vector<10x1x16xbf16>
    %c0_8 = arith.constant 0 : index
    %c0_9 = arith.constant 0 : index
    %c0_10 = arith.constant 0 : index
    %10 = vector.load %arg10[%c0_8, %c0_9, %c0_10] : memref<10x18x16xbf16, #tpu.memory_space<vmem>>, vector<10x1x16xbf16>
    tpu.vector_store %arg10[%c0_8, %c0_9, %c0_10], %9 {strides = array<i32>} : memref<10x18x16xbf16, #tpu.memory_space<vmem>>, vector<10x1x16xbf16>,
    %c0_11 = arith.constant 0 : index
    %c17 = arith.constant 17 : index
    %c0_12 = arith.constant 0 : index
    %11 = vector.load %arg10[%c0_11, %c17, %c0_12] : memref<10x18x16xbf16, #tpu.memory_space<vmem>>, vector<10x1x16xbf16>
    tpu.vector_store %arg10[%c0_11, %c17, %c0_12], %9 {strides = array<i32>} : memref<10x18x16xbf16, #tpu.memory_space<vmem>>, vector<10x1x16xbf16>,
    %c0_13 = arith.constant 0 : index
    %c1 = arith.constant 1 : index
    %c0_14 = arith.constant 0 : index
    %12 = vector.load %arg10[%c0_13, %c1, %c0_14] : memref<10x18x16xbf16, #tpu.memory_space<vmem>>, vector<1x16x16xbf16>
    tpu.vector_store %arg10[%c0_13, %c1, %c0_14], %4 {strides = array<i32>} : memref<10x18x16xbf16, #tpu.memory_space<vmem>>, vector<1x16x16xbf16>,
    %c9 = arith.constant 9 : index
    %c1_15 = arith.constant 1 : index
    %c0_16 = arith.constant 0 : index
    %13 = vector.load %arg10[%c9, %c1_15, %c0_16] : memref<10x18x16xbf16, #tpu.memory_space<vmem>>, vector<1x16x16xbf16>
    tpu.vector_store %arg10[%c9, %c1_15, %c0_16], %8 {strides = array<i32>} : memref<10x18x16xbf16, #tpu.memory_space<vmem>>, vector<1x16x16xbf16>,
    %c0_17 = arith.constant 0 : index
    %c0_18 = arith.constant 0 : index
    %c0_19 = arith.constant 0 : index
    %c0_20 = arith.constant 0 : index
    %14 = vector.load %arg2[%c0_17, %c0_18, %c0_19, %c0_20] : memref<1x8x16x16xbf16, #tpu.memory_space<vmem>>, vector<1x8x16x16xbf16>
    %15 = vector.shape_cast %14 : vector<1x8x16x16xbf16> to vector<8x16x16xbf16>
    %c1_21 = arith.constant 1 : index
    %c1_22 = arith.constant 1 : index
    %c0_23 = arith.constant 0 : index
    %16 = vector.load %arg10[%c1_21, %c1_22, %c0_23] : memref<10x18x16xbf16, #tpu.memory_space<vmem>>, vector<8x16x16xbf16>
    tpu.vector_store %arg10[%c1_21, %c1_22, %c0_23], %15 {strides = array<i32>} : memref<10x18x16xbf16, #tpu.memory_space<vmem>>, vector<8x16x16xbf16>,
    %c0_24 = arith.constant 0 : index
    %c0_25 = arith.constant 0 : index
    %c0_26 = arith.constant 0 : index
    %17 = vector.load %arg10[%c0_24, %c0_25, %c0_26] : memref<10x18x16xbf16, #tpu.memory_space<vmem>>, vector<8x16x16xbf16>
    %c0_27 = arith.constant 0 : index
    %c1_28 = arith.constant 1 : index
    %c0_29 = arith.constant 0 : index
    %18 = vector.load %arg10[%c0_27, %c1_28, %c0_29] : memref<10x18x16xbf16, #tpu.memory_space<vmem>>, vector<8x16x16xbf16>
    %c0_30 = arith.constant 0 : index
    %c2 = arith.constant 2 : index
    %c0_31 = arith.constant 0 : index
    %19 = vector.load %arg10[%c0_30, %c2, %c0_31] : memref<10x18x16xbf16, #tpu.memory_space<vmem>>, vector<8x16x16xbf16>
    %c1_32 = arith.constant 1 : index
    %c0_33 = arith.constant 0 : index
    %c0_34 = arith.constant 0 : index
    %20 = vector.load %arg10[%c1_32, %c0_33, %c0_34] : memref<10x18x16xbf16, #tpu.memory_space<vmem>>, vector<8x16x16xbf16>
    %c1_35 = arith.constant 1 : index
    %c1_36 = arith.constant 1 : index
    %c0_37 = arith.constant 0 : index
    %21 = vector.load %arg10[%c1_35, %c1_36, %c0_37] : memref<10x18x16xbf16, #tpu.memory_space<vmem>>, vector<8x16x16xbf16>
    %c1_38 = arith.constant 1 : index
    %c2_39 = arith.constant 2 : index
    %c0_40 = arith.constant 0 : index
    %22 = vector.load %arg10[%c1_38, %c2_39, %c0_40] : memref<10x18x16xbf16, #tpu.memory_space<vmem>>, vector<8x16x16xbf16>
    %c2_41 = arith.constant 2 : index
    %c0_42 = arith.constant 0 : index
    %c0_43 = arith.constant 0 : index
    %23 = vector.load %arg10[%c2_41, %c0_42, %c0_43] : memref<10x18x16xbf16, #tpu.memory_space<vmem>>, vector<8x16x16xbf16>
    %c2_44 = arith.constant 2 : index
    %c1_45 = arith.constant 1 : index
    %c0_46 = arith.constant 0 : index
    %24 = vector.load %arg10[%c2_44, %c1_45, %c0_46] : memref<10x18x16xbf16, #tpu.memory_space<vmem>>, vector<8x16x16xbf16>
    %c2_47 = arith.constant 2 : index
    %c2_48 = arith.constant 2 : index
    %c0_49 = arith.constant 0 : index
    %25 = vector.load %arg10[%c2_47, %c2_48, %c0_49] : memref<10x18x16xbf16, #tpu.memory_space<vmem>>, vector<8x16x16xbf16>
    %26 = tpu.concatenate %17, %18, %19, %20, %21, %22, %23, %24, %25 in 2 : vector<8x16x16xbf16>, vector<8x16x16xbf16>, vector<8x16x16xbf16>, vector<8x16x16xbf16>, vector<8x16x16xbf16>, vector<8x16x16xbf16>, vector<8x16x16xbf16>, vector<8x16x16xbf16>, vector<8x16x16xbf16> -> vector<8x16x144xbf16>
    %27 = vector.shape_cast %26 : vector<8x16x144xbf16> to vector<128x144xbf16>
    %c0_50 = arith.constant 0 : index
    %c0_51 = arith.constant 0 : index
    %28 = vector.load %arg5[%c0_50, %c0_51] : memref<144x8xbf16, #tpu.memory_space<vmem>>, vector<144x8xbf16>
    %cst_52 = arith.constant dense<0.000000e+00> : vector<128x8xf32>
    %29 = tpu.matmul %27, %28, %cst_52 {dimension_numbers = #tpu.dot_dimension_numbers<[1], [0], [0], [1], [0, 0, 1, 1], [], []>} : vector<128x144xbf16>, vector<144x8xbf16>, vector<128x8xf32> -> vector<128x8xf32>
    %c0_53 = arith.constant 0 : index
    %c0_54 = arith.constant 0 : index
    %30 = vector.load %arg6[%c0_53, %c0_54] : memref<1x8xf32, #tpu.memory_space<vmem>>, vector<1x8xf32>
    %31 = vector.broadcast %30 : vector<1x8xf32> to vector<128x8xf32>
    %32 = arith.addf %29, %31 : vector<128x8xf32>
    %33 = arith.negf %32 : vector<128x8xf32>
    %34 = math.exp %33 : vector<128x8xf32>
    %cst_55 = arith.constant 1.000000e+00 : f32
    %35 = vector.broadcast %cst_55 : f32 to vector<128x8xf32>
    %36 = arith.addf %35, %34 : vector<128x8xf32>
    %37 = arith.divf %35, %36 : vector<128x8xf32>
    %38 = arith.mulf %32, %37 : vector<128x8xf32>
    %39 = arith.truncf %38 : vector<128x8xf32> to vector<128x8xbf16>
    %c0_56 = arith.constant 0 : index
    %c0_57 = arith.constant 0 : index
    %40 = vector.load %arg7[%c0_56, %c0_57] : memref<8x16xbf16, #tpu.memory_space<vmem>>, vector<8x16xbf16>
    %cst_58 = arith.constant dense<0.000000e+00> : vector<128x16xf32>
    %41 = tpu.matmul %39, %40, %cst_58 {dimension_numbers = #tpu.dot_dimension_numbers<[1], [0], [0], [1], [0, 0, 1, 1], [], []>} : vector<128x8xbf16>, vector<8x16xbf16>, vector<128x16xf32> -> vector<128x16xf32>
    %c0_59 = arith.constant 0 : index
    %c0_60 = arith.constant 0 : index
    %42 = vector.load %arg8[%c0_59, %c0_60] : memref<1x16xf32, #tpu.memory_space<vmem>>, vector<1x16xf32>
    %43 = vector.broadcast %42 : vector<1x16xf32> to vector<128x16xf32>
    %44 = arith.addf %41, %43 : vector<128x16xf32>
    %45 = arith.negf %44 : vector<128x16xf32>
    %46 = math.exp %45 : vector<128x16xf32>
    %cst_61 = arith.constant 1.000000e+00 : f32
    %47 = vector.broadcast %cst_61 : f32 to vector<128x16xf32>
    %48 = arith.addf %47, %46 : vector<128x16xf32>
    %49 = arith.divf %47, %48 : vector<128x16xf32>
    %50 = arith.mulf %44, %49 : vector<128x16xf32>
    %51 = vector.shape_cast %21 : vector<8x16x16xbf16> to vector<128x16xbf16>
    %52 = arith.extf %51 : vector<128x16xbf16> to vector<128x16xf32>
    %53 = arith.addf %52, %50 : vector<128x16xf32>
    %54 = vector.shape_cast %53 : vector<128x16xf32> to vector<8x16x16xf32>
    %55 = arith.truncf %54 : vector<8x16x16xf32> to vector<8x16x16xbf16>
    %c0_62 = arith.constant 0 : index
    %c0_63 = arith.constant 0 : index
    %c0_64 = arith.constant 0 : index
    %c0_65 = arith.constant 0 : index
    %56 = vector.load %arg9[%c0_62, %c0_63, %c0_64, %c0_65] : memref<1x8x16x16xbf16, #tpu.memory_space<vmem>>, vector<1x8x16x16xbf16>
    %57 = vector.shape_cast %56 : vector<1x8x16x16xbf16> to vector<8x16x16xbf16>
    %58 = vector.shape_cast %55 : vector<8x16x16xbf16> to vector<1x8x16x16xbf16>
    tpu.vector_store %arg9[%c0_62, %c0_63, %c0_64, %c0_65], %58 {strides = array<i32>} : memref<1x8x16x16xbf16, #tpu.memory_space<vmem>>, vector<1x8x16x16xbf16>,
    return
  }
  func.func @transform_0(%arg0: i32, %arg1: i32) -> (i32, i32, i32, i32) {
    %c0_i32 = arith.constant 0 : i32
    %c0_i32_0 = arith.constant 0 : i32
    %c0_i32_1 = arith.constant 0 : i32
    return %arg0, %arg1, %c0_i32, %c0_i32_0 : i32, i32, i32, i32
  }
  func.func @transform_1(%arg0: i32, %arg1: i32) -> (i32, i32, i32, i32) {
    %c8_i32 = arith.constant 8 : i32
    %0 = arith.muli %arg1, %c8_i32 : i32
    %c1_i32 = arith.constant 1 : i32
    %1 = arith.subi %0, %c1_i32 : i32
    %c0_i32 = arith.constant 0 : i32
    %2 = arith.maxsi %1, %c0_i32 : i32
    %c0_i32_0 = arith.constant 0 : i32
    %c0_i32_1 = arith.constant 0 : i32
    %c0_i32_2 = arith.constant 0 : i32
    return %arg0, %2, %c0_i32_0, %c0_i32_1 : i32, i32, i32, i32
  }
  func.func @transform_2(%arg0: i32, %arg1: i32) -> (i32, i32, i32, i32) {
    %c8_i32 = arith.constant 8 : i32
    %0 = arith.muli %arg1, %c8_i32 : i32
    %c8_i32_0 = arith.constant 8 : i32
    %1 = arith.addi %0, %c8_i32_0 : i32
    %c15_i32 = arith.constant 15 : i32
    %2 = arith.minsi %1, %c15_i32 : i32
    %c0_i32 = arith.constant 0 : i32
    %c0_i32_1 = arith.constant 0 : i32
    %c0_i32_2 = arith.constant 0 : i32
    return %arg0, %2, %c0_i32, %c0_i32_1 : i32, i32, i32, i32
  }
  func.func @transform_3(%arg0: i32, %arg1: i32) -> (i32, i32) {
    %c0_i32 = arith.constant 0 : i32
    %c0_i32_0 = arith.constant 0 : i32
    %c0_i32_1 = arith.constant 0 : i32
    return %c0_i32, %c0_i32_0 : i32, i32
  }
  func.func @transform_4(%arg0: i32, %arg1: i32) -> (i32, i32) {
    %c0_i32 = arith.constant 0 : i32
    %c0_i32_0 = arith.constant 0 : i32
    %c0_i32_1 = arith.constant 0 : i32
    return %c0_i32, %c0_i32_0 : i32, i32
  }
  func.func @transform_5(%arg0: i32, %arg1: i32) -> (i32, i32) {
    %c0_i32 = arith.constant 0 : i32
    %c0_i32_0 = arith.constant 0 : i32
    %c0_i32_1 = arith.constant 0 : i32
    return %c0_i32, %c0_i32_0 : i32, i32
  }
  func.func @transform_6(%arg0: i32, %arg1: i32) -> (i32, i32) {
    %c0_i32 = arith.constant 0 : i32
    %c0_i32_0 = arith.constant 0 : i32
    %c0_i32_1 = arith.constant 0 : i32
    return %c0_i32, %c0_i32_0 : i32, i32
  }
  func.func @transform_7(%arg0: i32, %arg1: i32) -> (i32, i32, i32, i32) {
    %c0_i32 = arith.constant 0 : i32
    %c0_i32_0 = arith.constant 0 : i32
    %c0_i32_1 = arith.constant 0 : i32
    return %arg0, %arg1, %c0_i32, %c0_i32_0 : i32, i32, i32, i32
  }
}

</mosaic_0001>

<llo_original>
// kernel: repdark_forward.1
$region0: #{repdark_forward.1}
  #allocation0 [shape = 'u32[]', space=smem, size = 0x4, offset = 0x4, fixed_abs, tag = 'smem constant byte address 0x4 - core index']
  #allocation1 [shape = 'u32[144,128]{1,0:T(1,128)}', space=vmem, size = 0x12000, scoped, tag = 'internal scratch']
  #allocation2 [shape = 'bf16[10,18,16]{2,1,0:T(8,128)(2,1)}', space=vmem, size = 0xf000, scoped, tag = 'scratch operand']
  %s0 = inlined_call_operand.hbm [shape: bf16[2,16,16,16], index: 0, kind: input, shape index: {}, may-alias: {0,1,2}]
  %s1 = inlined_call_operand.hbm [shape: bf16[2,16,16,16], index: 1, kind: input, shape index: {}, may-alias: {0,1,2}]
  %s2 = inlined_call_operand.hbm [shape: bf16[2,16,16,16], index: 2, kind: input, shape index: {}, may-alias: {0,1,2}]
  %s3 = inlined_call_operand.vmem [shape: bf16[144,8], index: 3, kind: input, shape index: {}]
  %s4 = inlined_call_operand.vmem [shape: f32[1,8], index: 4, kind: input, shape index: {}]
  %s5 = inlined_call_operand.vmem [shape: bf16[8,16], index: 5, kind: input, shape index: {}]
  %s6 = inlined_call_operand.vmem [shape: f32[1,16], index: 6, kind: input, shape index: {}]
  %s7 = inlined_call_operand.hbm [shape: bf16[2,16,16,16], index: 7, kind: output, shape index: {}]
  %s8 = sld [smem:[#allocation0]]
  $region73: #{repdark_forward.1} parent=0
    _
  %s10 = ssub.s32 1, %s8
  %s11 = scalar_select 0, %s10, %s8
  $region1: #{repdark_forward.1} parent=0
    #allocation3 [shape = 'u8[65536]{0}', space=vmem, size = 0x10000, scoped, tag = 'input window, operand 0']
    #allocation4 [shape = 's32[2]{0}', space=sflag, size = 0x8, scoped, tag = 'scoped memory for repdark_forward.1']
    #allocation5 [shape = 's32[2]{0}', space=sflag, size = 0x8, scoped, tag = 'scoped memory for repdark_forward.1']
    #allocation6 [shape = 'u8[8192]{0}', space=vmem, size = 0x2000, scoped, tag = 'input window, operand 1']
    #allocation7 [shape = 's32[2]{0}', space=sflag, size = 0x8, scoped, tag = 'scoped memory for repdark_forward.1']
    #allocation8 [shape = 'u8[8192]{0}', space=vmem, size = 0x2000, scoped, tag = 'input window, operand 2']
    #allocation9 [shape = 'u8[65536]{0}', space=vmem, size = 0x10000, scoped, tag = 'output window, operand 0']
    %12 = vsyncpa [#allocation4], 0
    %s13 = scalar_lea.sflag [#allocation4], 1
    %14 = vsyncpa %s13, 0
    %15 = vsyncpa [#allocation7], 0
    %s16 = scalar_lea.sflag [#allocation7], 1
    %17 = vsyncpa %s16, 0
    %18 = vsyncpa [#allocation5], 0
    %s19 = scalar_lea.sflag [#allocation5], 1
    %20 = vsyncpa %s19, 0
    loop: start=0, step=1, limit=6
    $region2: #{repdark_forward.1} parent=1 // loop_pre_header
      _
    $region3: #{repdark_forward.1} parent=1 // loop_header
      %s22 = sphi 0, %s26
      %p23 = scmp.ge.s32.totalorder %s22, 6
      %s29 = sphi 0, %s41
      %s30 = sphi 0, %s37
      %s31 = sphi 0, %s29
      %s32 = sphi 0, %s30
      %s33 = sphi 0, %s31
      %s34 = sphi 0, %s32
      %s46 = sphi 0, %s48
      %s49 = sphi 0, %s46
      %s50 = sphi 0, %s49
      %s66 = sphi 0, %s50
      %s82 = sphi 0, %s84
      %s85 = sphi 0, %s82
      %s86 = sphi 0, %s85
      %s102 = sphi 0, %s86
      %s118 = sphi 0, %s120
      %s121 = sphi 0, %s118
      %s122 = sphi 0, %s121
      %s138 = sphi 0, %s122
      %s142 = sphi 0, %s142
      %s144 = sphi 0, %s142
      %s145 = sphi 0, %s144
      %s159 = sphi 0, %s145
      %s163 = sphi 0, %s163
      %s165 = sphi 0, %s163
      %s166 = sphi 0, %s165
      %s180 = sphi 0, %s166
      %s184 = sphi 0, %s184
      %s186 = sphi 0, %s184
      %s187 = sphi 0, %s186
      %s201 = sphi 0, %s187
      %s205 = sphi 0, %s205
      %s207 = sphi 0, %s205
      %s208 = sphi 0, %s207
      %s222 = sphi 0, %s208
      %s230 = sphi 0, %s232
      %s233 = sphi 0, %s230
      %s234 = sphi 0, %s233
      %s250 = sphi 0, %s234
    $region4: #{repdark_forward.1} parent=1 // loop_header_branch
      %25 = sbr.rel (%p23) target = $region8
    $region5: #{repdark_forward.1} parent=1 // loop_body
      %s27 = ssub.s32 %s22, 1
      %s28 = ssub.s32 %s22, 2
      %s35 = sadd.s32 1, %s30
      %p36 = scmp.ge.s32.totalorder %s35, 2
      %s37 = scalar_select %p36, 0, %s35
      %s38 = sadd.s32 1, %s29
      %s39 = scalar_select %p36, %s38, %s29
      %p40 = scmp.ge.s32.totalorder %s39, 2
      %s41 = scalar_select %p40, 0, %s39
      %s42 = ssub.s32 %s29, %s41
      %s43 = ssub.s32 %s30, %s37
      %s44 = sor.u32 %s42, %s43
      %p45 = scmp.eq.s32.totalorder %s44, 0
      %s47 = sadd.s32 %s46, 1
      %s48 = scalar_select %p45, %s46, %s47
      %p51 = pneg %p45
      %p52 = scmp.eq.s32.totalorder %s22, 3
      %p53 = por %p51, %p52
      %p54 = scmp.ne.s32.totalorder %s46, %s49
      %p55 = scmp.eq.s32.totalorder %s22, 0
      %p56 = por %p54, %p55
      %p57 = scmp.ne.s32.totalorder %s46, %s49
      %p58 = scmp.eq.s32.totalorder %s27, 3
      %p59 = por %p57, %p58
      %p60 = scmp.ne.s32.totalorder %s49, %s50
      %p61 = scmp.eq.s32.totalorder %s27, 0
      %p62 = por %p60, %p61
      %p63 = scmp.ne.s32.totalorder %s49, %s50
      %p64 = scmp.eq.s32.totalorder %s28, 3
      %p65 = por %p63, %p64
      %p67 = scmp.ne.s32.totalorder %s50, %s66
      %p68 = scmp.eq.s32.totalorder %s28, 0
      %p69 = por %p67, %p68
      %s70 = smul.u32 %s30, 8
      %s71 = ssub.s32 %s70, 1
      %p72 = scmp.gt.s32.totalorder %s71, 0
      %s73 = scalar_select %p72, %s71, 0
      %s74 = smul.u32 %s37, 8
      %s75 = ssub.s32 %s74, 1
      %p76 = scmp.gt.s32.totalorder %s75, 0
      %s77 = scalar_select %p76, %s75, 0
      %s78 = ssub.s32 %s29, %s41
      %s79 = ssub.s32 %s73, %s77
      %s80 = sor.u32 %s78, %s79
      %p81 = scmp.eq.s32.totalorder %s80, 0
      %s83 = sadd.s32 %s82, 1
      %s84 = scalar_select %p81, %s82, %s83
      %p87 = pneg %p81
      %p88 = scmp.eq.s32.totalorder %s22, 3
      %p89 = por %p87, %p88
      %p90 = scmp.ne.s32.totalorder %s82, %s85
      %p91 = scmp.eq.s32.totalorder %s22, 0
      %p92 = por %p90, %p91
      %p93 = scmp.ne.s32.totalorder %s82, %s85
      %p94 = scmp.eq.s32.totalorder %s27, 3
      %p95 = por %p93, %p94
      %p96 = scmp.ne.s32.totalorder %s85, %s86
      %p97 = scmp.eq.s32.totalorder %s27, 0
      %p98 = por %p96, %p97
      %p99 = scmp.ne.s32.totalorder %s85, %s86
      %p100 = scmp.eq.s32.totalorder %s28, 3
      %p101 = por %p99, %p100
      %p103 = scmp.ne.s32.totalorder %s86, %s102
      %p104 = scmp.eq.s32.totalorder %s28, 0
      %p105 = por %p103, %p104
      %s106 = smul.u32 %s30, 8
      %s107 = sadd.s32 %s106, 8
      %p108 = scmp.lt.s32.totalorder %s107, 15
      %s109 = scalar_select %p108, %s107, 15
      %s110 = smul.u32 %s37, 8
      %s111 = sadd.s32 %s110, 8
      %p112 = scmp.lt.s32.totalorder %s111, 15
      %s113 = scalar_select %p112, %s111, 15
      %s114 = ssub.s32 %s29, %s41
      %s115 = ssub.s32 %s109, %s113
      %s116 = sor.u32 %s114, %s115
      %p117 = scmp.eq.s32.totalorder %s116, 0
      %s119 = sadd.s32 %s118, 1
      %s120 = scalar_select %p117, %s118, %s119
      %p123 = pneg %p117
      %p124 = scmp.eq.s32.totalorder %s22, 3
      %p125 = por %p123, %p124
      %p126 = scmp.ne.s32.totalorder %s118, %s121
      %p127 = scmp.eq.s32.totalorder %s22, 0
      %p128 = por %p126, %p127
      %p129 = scmp.ne.s32.totalorder %s118, %s121
      %p130 = scmp.eq.s32.totalorder %s27, 3
      %p131 = por %p129, %p130
      %p132 = scmp.ne.s32.totalorder %s121, %s122
      %p133 = scmp.eq.s32.totalorder %s27, 0
      %p134 = por %p132, %p133
      %p135 = scmp.ne.s32.totalorder %s121, %s122
      %p136 = scmp.eq.s32.totalorder %s28, 3
      %p137 = por %p135, %p136
      %p139 = scmp.ne.s32.totalorder %s122, %s138
      %p140 = scmp.eq.s32.totalorder %s28, 0
      %p141 = por %p139, %p140
      %s143 = sadd.s32 %s142, 1
      %p146 = scmp.eq.s32.totalorder %s22, 3
      %p147 = scmp.ne.s32.totalorder %s142, %s144
      %p148 = scmp.eq.s32.totalorder %s22, 0
      %p149 = por %p147, %p148
      %p150 = scmp.ne.s32.totalorder %s142, %s144
      %p151 = scmp.eq.s32.totalorder %s27, 3
      %p152 = por %p150, %p151
      %p153 = scmp.ne.s32.totalorder %s144, %s145
      %p154 = scmp.eq.s32.totalorder %s27, 0
      %p155 = por %p153, %p154
      %p156 = scmp.ne.s32.totalorder %s144, %s145
      %p157 = scmp.eq.s32.totalorder %s28, 3
      %p158 = por %p156, %p157
      %p160 = scmp.ne.s32.totalorder %s145, %s159
      %p161 = scmp.eq.s32.totalorder %s28, 0
      %p162 = por %p160, %p161
      %s164 = sadd.s32 %s163, 1
      %p167 = scmp.eq.s32.totalorder %s22, 3
      %p168 = scmp.ne.s32.totalorder %s163, %s165
      %p169 = scmp.eq.s32.totalorder %s22, 0
      %p170 = por %p168, %p169
      %p171 = scmp.ne.s32.totalorder %s163, %s165
      %p172 = scmp.eq.s32.totalorder %s27, 3
      %p173 = por %p171, %p172
      %p174 = scmp.ne.s32.totalorder %s165, %s166
      %p175 = scmp.eq.s32.totalorder %s27, 0
      %p176 = por %p174, %p175
      %p177 = scmp.ne.s32.totalorder %s165, %s166
      %p178 = scmp.eq.s32.totalorder %s28, 3
      %p179 = por %p177, %p178
      %p181 = scmp.ne.s32.totalorder %s166, %s180
      %p182 = scmp.eq.s32.totalorder %s28, 0
      %p183 = por %p181, %p182
      %s185 = sadd.s32 %s184, 1
      %p188 = scmp.eq.s32.totalorder %s22, 3
      %p189 = scmp.ne.s32.totalorder %s184, %s186
      %p190 = scmp.eq.s32.totalorder %s22, 0
      %p191 = por %p189, %p190
      %p192 = scmp.ne.s32.totalorder %s184, %s186
      %p193 = scmp.eq.s32.totalorder %s27, 3
      %p194 = por %p192, %p193
      %p195 = scmp.ne.s32.totalorder %s186, %s187
      %p196 = scmp.eq.s32.totalorder %s27, 0
      %p197 = por %p195, %p196
      %p198 = scmp.ne.s32.totalorder %s186, %s187
      %p199 = scmp.eq.s32.totalorder %s28, 3
      %p200 = por %p198, %p199
      %p202 = scmp.ne.s32.totalorder %s187, %s201
      %p203 = scmp.eq.s32.totalorder %s28, 0
      %p204 = por %p202, %p203
      %s206 = sadd.s32 %s205, 1
      %p209 = scmp.eq.s32.totalorder %s22, 3
      %p210 = scmp.ne.s32.totalorder %s205, %s207
      %p211 = scmp.eq.s32.totalorder %s22, 0
      %p212 = por %p210, %p211
      %p213 = scmp.ne.s32.totalorder %s205, %s207
      %p214 = scmp.eq.s32.totalorder %s27, 3
      %p215 = por %p213, %p214
      %p216 = scmp.ne.s32.totalorder %s207, %s208
      %p217 = scmp.eq.s32.totalorder %s27, 0
      %p218 = por %p216, %p217
      %p219 = scmp.ne.s32.totalorder %s207, %s208
      %p220 = scmp.eq.s32.totalorder %s28, 3
      %p221 = por %p219, %p220
      %p223 = scmp.ne.s32.totalorder %s208, %s222
      %p224 = scmp.eq.s32.totalorder %s28, 0
      %p225 = por %p223, %p224
      %s226 = ssub.s32 %s29, %s41
      %s227 = ssub.s32 %s30, %s37
      %s228 = sor.u32 %s226, %s227
      %p229 = scmp.eq.s32.totalorder %s228, 0
      %s231 = sadd.s32 %s230, 1
      %s232 = scalar_select %p229, %s230, %s231
      %p235 = pneg %p229
      %p236 = scmp.eq.s32.totalorder %s22, 3
      %p237 = por %p235, %p236
      %p238 = scmp.ne.s32.totalorder %s230, %s233
      %p239 = scmp.eq.s32.totalorder %s22, 0
      %p240 = por %p238, %p239
      %p241 = scmp.ne.s32.totalorder %s230, %s233
      %p242 = scmp.eq.s32.totalorder %s27, 3
      %p243 = por %p241, %p242
      %p244 = scmp.ne.s32.totalorder %s233, %s234
      %p245 = scmp.eq.s32.totalorder %s27, 0
      %p246 = por %p244, %p245
      %p247 = scmp.ne.s32.totalorder %s233, %s234
      %p248 = scmp.eq.s32.totalorder %s28, 3
      %p249 = por %p247, %p248
      %p251 = scmp.ne.s32.totalorder %s234, %s250
      %p252 = scmp.eq.s32.totalorder %s28, 0
      %p253 = por %p251, %p252
      %p254 = scmp.le.s32.totalorder 1, %s22
      %p255 = scmp.lt.s32.totalorder %s22, 5
      %p256 = pnand %p254, %p255
      %p257 = pneg %p256
      // Predicated region
      $region9: #{repdark_forward.1} parent=5 // pred_check
        _
      $region10: #{repdark_forward.1} parent=5 // pred_check_branch
        %259 = sbr.rel (%p256) target = $region12
      $region11: #{repdark_forward.1} parent=5 // pred_region
        %s260 = ssub.s32 %s22, 1
        // Predicated region
        $region13: #{repdark_forward.1} parent=11 // pred_check
          %p261 = pneg %p155
        $region14: #{repdark_forward.1} parent=11 // pred_check_branch
          %263 = sbr.rel (%p261) target = $region16
        $region15: #{repdark_forward.1} parent=11 // pred_region
          _
        $region16: #{repdark_forward.1} parent=11 // pred_fallthru
          _
        // Predicated region
        $region17: #{repdark_forward.1} parent=11 // pred_check
          %p264 = pneg %p176
        $region18: #{repdark_forward.1} parent=11 // pred_check_branch
          %266 = sbr.rel (%p264) target = $region20
        $region19: #{repdark_forward.1} parent=11 // pred_region
          _
        $region20: #{repdark_forward.1} parent=11 // pred_fallthru
          _
        // Predicated region
        $region21: #{repdark_forward.1} parent=11 // pred_check
          %p267 = pneg %p197
        $region22: #{repdark_forward.1} parent=11 // pred_check_branch
          %269 = sbr.rel (%p267) target = $region24
        $region23: #{repdark_forward.1} parent=11 // pred_region
          _
        $region24: #{repdark_forward.1} parent=11 // pred_fallthru
          _
        // Predicated region
        $region25: #{repdark_forward.1} parent=11 // pred_check
          %p270 = pneg %p218
        $region26: #{repdark_forward.1} parent=11 // pred_check_branch
          %272 = sbr.rel (%p270) target = $region28
        $region27: #{repdark_forward.1} parent=11 // pred_region
          _
        $region28: #{repdark_forward.1} parent=11 // pred_fallthru
          _
      $region12: #{repdark_forward.1} parent=5 // pred_fallthru
        _
      %p273 = scmp.lt.s32.totalorder %s22, 4
      // Predicated region
      $region29: #{repdark_forward.1} parent=5 // pred_check
        %p274 = pneg %p273
      $region30: #{repdark_forward.1} parent=5 // pred_check_branch
        %276 = sbr.rel (%p274) target = $region32
      $region31: #{repdark_forward.1} parent=5 // pred_region
        // Predicated region
        $region33: #{repdark_forward.1} parent=31 // pred_check
          %p277 = pneg %p56
        $region34: #{repdark_forward.1} parent=31 // pred_check_branch
          %279 = sbr.rel (%p277) target = $region36
        $region35: #{repdark_forward.1} parent=31 // pred_region
          %s280 = sand.u32 %s46, 1
          %s281 = scalar_lea.sflag [#allocation4], %s280
          %s282 = sand.u32 %s46, 1
          %s283 = smul.addr %s282, 64
          %s284 = scalar_lea.vmem [#allocation3], %s283
          %s285 = smul.u32 8, %s30
          %s287 = ssub.s32 1024, 1024
          %288 = vsyncadd %s281, %s287
          %s289 = smul.addr %s285, 2
          %s290 = smul.addr %s29, 32
          %s291 = sadd.s32 %s289, %s290
          %s292 = smul.addr %s291, 64
          %s293 = scalar_lea.hbm %s0, %s292
          %s294 = sshll.u32 %s284, 4
          %s295 = int_to_ptr.vmem [resolvable:$true] %s294
          %300 = dma.hbm_to_vmem [thread:$0]  %s293, 1024, %s295, %s281, 64, 64, 4
        $region36: #{repdark_forward.1} parent=31 // pred_fallthru
          _
        // Predicated region
        $region37: #{repdark_forward.1} parent=31 // pred_check
          %p301 = pneg %p92
        $region38: #{repdark_forward.1} parent=31 // pred_check_branch
          %303 = sbr.rel (%p301) target = $region40
        $region39: #{repdark_forward.1} parent=31 // pred_region
          %s304 = sand.u32 %s22, 1
          %s305 = scalar_lea.sflag [#allocation7], %s304
          %s306 = sand.u32 %s82, 1
          %s307 = smul.addr %s306, 8
          %s308 = scalar_lea.vmem [#allocation6], %s307
          %s309 = smul.u32 %s30, 8
          %s310 = ssub.s32 %s309, 1
          %p311 = scmp.gt.s32.totalorder %s310, 0
          %s312 = scalar_select %p311, %s310, 0
          %s314 = ssub.s32 128, 128
          %315 = vsyncadd %s305, %s314
          %s316 = smul.addr %s312, 2
          %s317 = smul.addr %s29, 32
          %s318 = sadd.s32 %s316, %s317
          %s319 = smul.addr %s318, 64
          %s320 = scalar_lea.hbm %s1, %s319
          %s321 = sshll.u32 %s308, 4
          %s322 = int_to_ptr.vmem [resolvable:$true] %s321
          %327 = dma.hbm_to_vmem [thread:$0]  %s320, 128, %s322, %s305, 64, 64, 4
        $region40: #{repdark_forward.1} parent=31 // pred_fallthru
          _
        // Predicated region
        $region41: #{repdark_forward.1} parent=31 // pred_check
          %p328 = pneg %p128
        $region42: #{repdark_forward.1} parent=31 // pred_check_branch
          %330 = sbr.rel (%p328) target = $region44
        $region43: #{repdark_forward.1} parent=31 // pred_region
          %s331 = sand.u32 %s22, 1
          %s332 = scalar_lea.sflag [#allocation7], %s331
          %s333 = sand.u32 %s118, 1
          %s334 = smul.addr %s333, 8
          %s335 = scalar_lea.vmem [#allocation8], %s334
          %s336 = smul.u32 %s30, 8
          %s337 = sadd.s32 %s336, 8
          %p338 = scmp.lt.s32.totalorder %s337, 15
          %s339 = scalar_select %p338, %s337, 15
          %s341 = ssub.s32 128, 128
          %342 = vsyncadd %s332, %s341
          %s343 = smul.addr %s339, 2
          %s344 = smul.addr %s29, 32
          %s345 = sadd.s32 %s343, %s344
          %s346 = smul.addr %s345, 64
          %s347 = scalar_lea.hbm %s2, %s346
          %s348 = sshll.u32 %s335, 4
          %s349 = int_to_ptr.vmem [resolvable:$true] %s348
          %354 = dma.hbm_to_vmem [thread:$0]  %s347, 128, %s349, %s332, 64, 64, 4
        $region44: #{repdark_forward.1} parent=31 // pred_fallthru
          _
      $region32: #{repdark_forward.1} parent=5 // pred_fallthru
        _
      %p355 = scmp.le.s32.totalorder 1, %s22
      %p356 = scmp.lt.s32.totalorder %s22, 5
      %p357 = pnand %p355, %p356
      %p358 = pneg %p357
      // Predicated region
      $region45: #{repdark_forward.1} parent=5 // pred_check
        _
      $region46: #{repdark_forward.1} parent=5 // pred_check_branch
        %360 = sbr.rel (%p357) target = $region48
      $region47: #{repdark_forward.1} parent=5 // pred_region
        %s361 = ssub.s32 %s22, 1
        %s362 = sand.u32 %s49, 1
        %s363 = scalar_lea.sflag [#allocation4], %s362
        %s364 = sand.u32 %s49, 1
        %s365 = smul.addr %s364, 64
        %s366 = scalar_lea.vmem [#allocation3], %s365
        // Predicated region
        $region49: #{repdark_forward.1} parent=47 // pred_check
          %p367 = pneg %p62
        $region50: #{repdark_forward.1} parent=47 // pred_check_branch
          %369 = sbr.rel (%p367) target = $region52
        $region51: #{repdark_forward.1} parent=47 // pred_region
          %370 = dma.done %s363, 1024
        $region52: #{repdark_forward.1} parent=47 // pred_fallthru
          _
        %s371 = sand.u32 %s27, 1
        %s372 = scalar_lea.sflag [#allocation7], %s371
        %s373 = sand.u32 %s85, 1
        %s374 = smul.addr %s373, 8
        %s375 = scalar_lea.vmem [#allocation6], %s374
        // Predicated region
        $region53: #{repdark_forward.1} parent=47 // pred_check
          %p376 = pneg %p98
        $region54: #{repdark_forward.1} parent=47 // pred_check_branch
          %378 = sbr.rel (%p376) target = $region56
        $region55: #{repdark_forward.1} parent=47 // pred_region
          %379 = dma.done %s372, 128
        $region56: #{repdark_forward.1} parent=47 // pred_fallthru
          _
        %s380 = sand.u32 %s27, 1
        %s381 = scalar_lea.sflag [#allocation7], %s380
        %s382 = sand.u32 %s121, 1
        %s383 = smul.addr %s382, 8
        %s384 = scalar_lea.vmem [#allocation8], %s383
        // Predicated region
        $region57: #{repdark_forward.1} parent=47 // pred_check
          %p385 = pneg %p134
        $region58: #{repdark_forward.1} parent=47 // pred_check_branch
          %387 = sbr.rel (%p385) target = $region60
        $region59: #{repdark_forward.1} parent=47 // pred_region
          %388 = dma.done %s381, 128
        $region60: #{repdark_forward.1} parent=47 // pred_fallthru
          _
        %s389 = sand.u32 %s49, 1
        %s390 = scalar_lea.sflag [#allocation4], %s389
        %s391 = sand.u32 %s49, 1
        %s392 = smul.addr %s391, 64
        %s393 = scalar_lea.vmem [#allocation3], %s392
        %p394 = pneg %p62
        %p395 = pneg %p59
        %s396 = sand.u32 %s27, 1
        %s397 = scalar_lea.sflag [#allocation7], %s396
        %s398 = sand.u32 %s85, 1
        %s399 = smul.addr %s398, 8
        %s400 = scalar_lea.vmem [#allocation6], %s399
        %p401 = pneg %p98
        %p402 = pneg %p95
        %s403 = sand.u32 %s27, 1
        %s404 = scalar_lea.sflag [#allocation7], %s403
        %s405 = sand.u32 %s121, 1
        %s406 = smul.addr %s405, 8
        %s407 = scalar_lea.vmem [#allocation8], %s406
        %p408 = pneg %p134
        %p409 = pneg %p131
        %p410 = pneg %p155
        %p411 = pneg %p152
        %p412 = pneg %p176
        %p413 = pneg %p173
        %p414 = pneg %p197
        %p415 = pneg %p194
        %p416 = pneg %p218
        %p417 = pneg %p215
        %p418 = pneg %p246
        %p419 = pneg %p243
        %s420 = sand.u32 %s233, 1
        %s421 = scalar_lea.sflag [#allocation5], %s420
        %s422 = sand.u32 %s233, 1
        %s423 = smul.addr %s422, 64
        %s424 = scalar_lea.vmem [#allocation9], %s423
        %s425 = smul.u32 8, %s32
        %s426 = smul.u32 %s32, 8
        %s427 = ssub.s32 %s426, 1
        %p428 = scmp.gt.s32.totalorder %s427, 0
        %s429 = scalar_select %p428, %s427, 0
        %s430 = smul.u32 %s32, 8
        %s431 = sadd.s32 %s430, 8
        %p432 = scmp.lt.s32.totalorder %s431, 15
        %s433 = scalar_select %p432, %s431, 15
        %s434 = smul.u32 8, %s32
        %p436 = scmp.gt.s32.totalorder %s32, 0
        %v437 = vld [vmem:[%s375] sm:$0xf]
        %v438 = vld [vmem:[%s375 + $0x4] sm:$0xf]
        %s439 = scalar_select %p436, 1, 0
        %v440 = vstv %s439
        %vm441 = vcmp.eq.s32.totalorder %v440, 1
        %v442 = vsel %vm441, %v437, 0
        %v443 = vsel %vm441, %v438, 0
        %p444 = scmp.lt.s32.totalorder %s32, 1
        %v445 = vld [vmem:[%s384] sm:$0xf]
        %v446 = vld [vmem:[%s384 + $0x4] sm:$0xf]
        %s447 = scalar_select %p444, 1, 0
        %v448 = vstv %s447
        %vm449 = vcmp.eq.s32.totalorder %v448, 1
        %v450 = vsel %vm449, %v445, 0
        %v451 = vsel %vm449, %v446, 0
        %vm452 = vcmask 122880
        %vm453 = vsmask.f32 256
        %vm454 = vmand %vm452, %vm453
        %v455 = vld [vmem:[#allocation2] sm:$0x1]
        %v456 = vsel %vm454, 0, %v455
        %457 = vst [vmem:[#allocation2] sm:$0x1] %v456
        %v458 = vld [vmem:[#allocation2 + $0xc] sm:$0x1]
        %v459 = vsel %vm454, 0, %v458
        %460 = vst [vmem:[#allocation2 + $0xc] sm:$0x1] %v459
        %v461 = vld [vmem:[#allocation2 + $0x18] sm:$0x1]
        %v462 = vsel %vm454, 0, %v461
        %463 = vst [vmem:[#allocation2 + $0x18] sm:$0x1] %v462
        %v464 = vld [vmem:[#allocation2 + $0x24] sm:$0x1]
        %v465 = vsel %vm454, 0, %v464
        %466 = vst [vmem:[#allocation2 + $0x24] sm:$0x1] %v465
        %v467 = vld [vmem:[#allocation2 + $0x30] sm:$0x1]
        %v468 = vsel %vm454, 0, %v467
        %469 = vst [vmem:[#allocation2 + $0x30] sm:$0x1] %v468
        %v470 = vld [vmem:[#allocation2 + $0x3c] sm:$0x1]
        %v471 = vsel %vm454, 0, %v470
        %472 = vst [vmem:[#allocation2 + $0x3c] sm:$0x1] %v471
        %v473 = vld [vmem:[#allocation2 + $0x48] sm:$0x1]
        %v474 = vsel %vm454, 0, %v473
        %475 = vst [vmem:[#allocation2 + $0x48] sm:$0x1] %v474
        %v476 = vld [vmem:[#allocation2 + $0x54] sm:$0x1]
        %v477 = vsel %vm454, 0, %v476
        %478 = vst [vmem:[#allocation2 + $0x54] sm:$0x1] %v477
        %v479 = vld [vmem:[#allocation2 + $0x60] sm:$0x1]
        %v480 = vsel %vm454, 0, %v479
        %481 = vst [vmem:[#allocation2 + $0x60] sm:$0x1] %v480
        %v482 = vld [vmem:[#allocation2 + $0x6c] sm:$0x1]
        %v483 = vsel %vm454, 0, %v482
        %484 = vst [vmem:[#allocation2 + $0x6c] sm:$0x1] %v483
        %vm485 = vsmask.f32 7938
        %vm486 = vmand %vm452, %vm485
        %v487 = vld [vmem:[#allocation2 + $0x8] sm:$0x1]
        %v488 = vsel %vm486, 0, %v487
        %489 = vst [vmem:[#allocation2 + $0x8] sm:$0x1] %v488
        %v490 = vld [vmem:[#allocation2 + $0x14] sm:$0x1]
        %v491 = vsel %vm486, 0, %v490
        %492 = vst [vmem:[#allocation2 + $0x14] sm:$0x1] %v491
        %v493 = vld [vmem:[#allocation2 + $0x20] sm:$0x1]
        %v494 = vsel %vm486, 0, %v493
        %495 = vst [vmem:[#allocation2 + $0x20] sm:$0x1] %v494
        %v496 = vld [vmem:[#allocation2 + $0x2c] sm:$0x1]
        %v497 = vsel %vm486, 0, %v496
        %498 = vst [vmem:[#allocation2 + $0x2c] sm:$0x1] %v497
        %v499 = vld [vmem:[#allocation2 + $0x38] sm:$0x1]
        %v500 = vsel %vm486, 0, %v499
        %501 = vst [vmem:[#allocation2 + $0x38] sm:$0x1] %v500
        %v502 = vld [vmem:[#allocation2 + $0x44] sm:$0x1]
        %v503 = vsel %vm486, 0, %v502
        %504 = vst [vmem:[#allocation2 + $0x44] sm:$0x1] %v503
        %v505 = vld [vmem:[#allocation2 + $0x50] sm:$0x1]
        %v506 = vsel %vm486, 0, %v505
        %507 = vst [vmem:[#allocation2 + $0x50] sm:$0x1] %v506
        %v508 = vld [vmem:[#allocation2 + $0x5c] sm:$0x1]
        %v509 = vsel %vm486, 0, %v508
        %510 = vst [vmem:[#allocation2 + $0x5c] sm:$0x1] %v509
        %v511 = vld [vmem:[#allocation2 + $0x68] sm:$0x1]
        %v512 = vsel %vm486, 0, %v511
        %513 = vst [vmem:[#allocation2 + $0x68] sm:$0x1] %v512
        %v514 = vld [vmem:[#allocation2 + $0x74] sm:$0x1]
        %v515 = vsel %vm486, 0, %v514
        %516 = vst [vmem:[#allocation2 + $0x74] sm:$0x1] %v515
        %vm517 = vsmask.f32 4368
        %vm518 = vmor %vm453, %vm517
        %v520 = vshrl.u32 %v442, 16
        %v522 = vrot.slane %v520, 7
        %v523 = vshll.u32 %v442, 16
        %v525 = vor.u32 %v522, %v523
        %v526 = vrot.slane %v522, 4
        %v528 = vshrl.u32 %v443, 16
        %v530 = vrot.slane %v528, 7
        %v531 = vshll.u32 %v443, 16
        %v533 = vor.u32 %v530, %v531
        %v534 = vsel %vm518, %v526, %v533
        %v535 = vrot.slane %v530, 4
        %vm539 = vcmask 125952
        %vm540 = vmand %vm539, %vm485
        %v541 = vld [vmem:[#allocation2] sm:$0xf]
        %v542 = vsel %vm540, %v525, %v541
        %543 = vst [vmem:[#allocation2] sm:$0xf] %v542
        %vm544 = vcmask 125952
        %545 = vst.msk [vmem:[#allocation2 + $0x4] sm:$0xf] %vm544, %v534
        %v546 = vld [vmem:[#allocation2 + $0x8] sm:$0x1]
        %v547 = vsel %vm454, %v535, %v546
        %548 = vst [vmem:[#allocation2 + $0x8] sm:$0x1] %v547
        %v550 = vshrl.u32 %v450, 16
        %v552 = vrot.slane %v550, 7
        %v553 = vshll.u32 %v450, 16
        %v555 = vor.u32 %v552, %v553
        %v556 = vrot.slane %v552, 4
        %v558 = vshrl.u32 %v451, 16
        %v560 = vrot.slane %v558, 7
        %v561 = vshll.u32 %v451, 16
        %v563 = vor.u32 %v560, %v561
        %v564 = vsel %vm518, %v556, %v563
        %v565 = vrot.slane %v560, 4
        %s569 = scalar_lea.vmem [#allocation2], 108
        %v570 = vld [vmem:[%s569] sm:$0xf]
        %v571 = vsel %vm540, %v555, %v570
        %572 = vst [vmem:[%s569] sm:$0xf] %v571
        %573 = vst.msk [vmem:[%s569 + $0x4] sm:$0xf] %vm544, %v564
        %v574 = vld [vmem:[%s569 + $0x8] sm:$0x1]
        %v575 = vsel %vm454, %v565, %v574
        %576 = vst [vmem:[%s569 + $0x8] sm:$0x1] %v575
        %v577 = vld [vmem:[%s366] sm:$0xf]
        %v578 = vld [vmem:[%s366 + $0x4] sm:$0xf]
        %v579 = vld [vmem:[%s366 + $0x8] sm:$0xf]
        %v580 = vld [vmem:[%s366 + $0xc] sm:$0xf]
        %v581 = vld [vmem:[%s366 + $0x10] sm:$0xf]
        %v582 = vld [vmem:[%s366 + $0x14] sm:$0xf]
        %v583 = vld [vmem:[%s366 + $0x18] sm:$0xf]
        %v584 = vld [vmem:[%s366 + $0x1c] sm:$0xf]
        %v585 = vld [vmem:[%s366 + $0x20] sm:$0xf]
        %v586 = vld [vmem:[%s366 + $0x24] sm:$0xf]
        %v587 = vld [vmem:[%s366 + $0x28] sm:$0xf]
        %v588 = vld [vmem:[%s366 + $0x2c] sm:$0xf]
        %v589 = vld [vmem:[%s366 + $0x30] sm:$0xf]
        %v590 = vld [vmem:[%s366 + $0x34] sm:$0xf]
        %v591 = vld [vmem:[%s366 + $0x38] sm:$0xf]
        %v592 = vld [vmem:[%s366 + $0x3c] sm:$0xf]
        %v594 = vshrl.u32 %v577, 16
        %v596 = vrot.slane %v594, 7
        %v597 = vshll.u32 %v577, 16
        %v599 = vor.u32 %v596, %v597
        %v600 = vrot.slane %v596, 4
        %v602 = vshrl.u32 %v578, 16
        %v604 = vrot.slane %v602, 7
        %v605 = vshll.u32 %v578, 16
        %v607 = vor.u32 %v604, %v605
        %v608 = vsel %vm518, %v600, %v607
        %v609 = vrot.slane %v604, 4
        %v611 = vshrl.u32 %v579, 16
        %v613 = vrot.slane %v611, 7
        %v614 = vshll.u32 %v579, 16
        %v616 = vor.u32 %v613, %v614
        %v617 = vrot.slane %v613, 4
        %v619 = vshrl.u32 %v580, 16
        %v621 = vrot.slane %v619, 7
        %v622 = vshll.u32 %v580, 16
        %v624 = vor.u32 %v621, %v622
        %v625 = vsel %vm518, %v617, %v624
        %v626 = vrot.slane %v621, 4
        %v628 = vshrl.u32 %v581, 16
        %v630 = vrot.slane %v628, 7
        %v631 = vshll.u32 %v581, 16
        %v633 = vor.u32 %v630, %v631
        %v634 = vrot.slane %v630, 4
        %v636 = vshrl.u32 %v582, 16
        %v638 = vrot.slane %v636, 7
        %v639 = vshll.u32 %v582, 16
        %v641 = vor.u32 %v638, %v639
        %v642 = vsel %vm518, %v634, %v641
        %v643 = vrot.slane %v638, 4
        %v645 = vshrl.u32 %v583, 16
        %v647 = vrot.slane %v645, 7
        %v648 = vshll.u32 %v583, 16
        %v650 = vor.u32 %v647, %v648
        %v651 = vrot.slane %v647, 4
        %v653 = vshrl.u32 %v584, 16
        %v655 = vrot.slane %v653, 7
        %v656 = vshll.u32 %v584, 16
        %v658 = vor.u32 %v655, %v656
        %v659 = vsel %vm518, %v651, %v658
        %v660 = vrot.slane %v655, 4
        %v662 = vshrl.u32 %v585, 16
        %v664 = vrot.slane %v662, 7
        %v665 = vshll.u32 %v585, 16
        %v667 = vor.u32 %v664, %v665
        %v668 = vrot.slane %v664, 4
        %v670 = vshrl.u32 %v586, 16
        %v672 = vrot.slane %v670, 7
        %v673 = vshll.u32 %v586, 16
        %v675 = vor.u32 %v672, %v673
        %v676 = vsel %vm518, %v668, %v675
        %v677 = vrot.slane %v672, 4
        %v679 = vshrl.u32 %v587, 16
        %v681 = vrot.slane %v679, 7
        %v682 = vshll.u32 %v587, 16
        %v684 = vor.u32 %v681, %v682
        %v685 = vrot.slane %v681, 4
        %v687 = vshrl.u32 %v588, 16
        %v689 = vrot.slane %v687, 7
        %v690 = vshll.u32 %v588, 16
        %v692 = vor.u32 %v689, %v690
        %v693 = vsel %vm518, %v685, %v692
        %v694 = vrot.slane %v689, 4
        %v696 = vshrl.u32 %v589, 16
        %v698 = vrot.slane %v696, 7
        %v699 = vshll.u32 %v589, 16
        %v701 = vor.u32 %v698, %v699
        %v702 = vrot.slane %v698, 4
        %v704 = vshrl.u32 %v590, 16
        %v706 = vrot.slane %v704, 7
        %v707 = vshll.u32 %v590, 16
        %v709 = vor.u32 %v706, %v707
        %v710 = vsel %vm518, %v702, %v709
        %v711 = vrot.slane %v706, 4
        %v713 = vshrl.u32 %v591, 16
        %v715 = vrot.slane %v713, 7
        %v716 = vshll.u32 %v591, 16
        %v718 = vor.u32 %v715, %v716
        %v719 = vrot.slane %v715, 4
        %v721 = vshrl.u32 %v592, 16
        %v723 = vrot.slane %v721, 7
        %v724 = vshll.u32 %v592, 16
        %v726 = vor.u32 %v723, %v724
        %v727 = vsel %vm518, %v719, %v726
        %v728 = vrot.slane %v723, 4
        %s753 = scalar_lea.vmem [#allocation2], 12
        %v754 = vld [vmem:[%s753] sm:$0xf]
        %v755 = vsel %vm540, %v599, %v754
        %756 = vst [vmem:[%s753] sm:$0xf] %v755
        %757 = vst.msk [vmem:[%s753 + $0x4] sm:$0xf] %vm544, %v608
        %v758 = vld [vmem:[%s753 + $0x8] sm:$0x1]
        %v759 = vsel %vm454, %v609, %v758
        %760 = vst [vmem:[%s753 + $0x8] sm:$0x1] %v759
        %v761 = vld [vmem:[%s753 + $0xc] sm:$0xf]
        %v762 = vsel %vm540, %v616, %v761
        %763 = vst [vmem:[%s753 + $0xc] sm:$0xf] %v762
        %764 = vst.msk [vmem:[%s753 + $0x10] sm:$0xf] %vm544, %v625
        %v765 = vld [vmem:[%s753 + $0x14] sm:$0x1]
        %v766 = vsel %vm454, %v626, %v765
        %767 = vst [vmem:[%s753 + $0x14] sm:$0x1] %v766
        %v768 = vld [vmem:[%s753 + $0x18] sm:$0xf]
        %v769 = vsel %vm540, %v633, %v768
        %770 = vst [vmem:[%s753 + $0x18] sm:$0xf] %v769
        %771 = vst.msk [vmem:[%s753 + $0x1c] sm:$0xf] %vm544, %v642
        %v772 = vld [vmem:[%s753 + $0x20] sm:$0x1]
        %v773 = vsel %vm454, %v643, %v772
        %774 = vst [vmem:[%s753 + $0x20] sm:$0x1] %v773
        %v775 = vld [vmem:[%s753 + $0x24] sm:$0xf]
        %v776 = vsel %vm540, %v650, %v775
        %777 = vst [vmem:[%s753 + $0x24] sm:$0xf] %v776
        %778 = vst.msk [vmem:[%s753 + $0x28] sm:$0xf] %vm544, %v659
        %v779 = vld [vmem:[%s753 + $0x2c] sm:$0x1]
        %v780 = vsel %vm454, %v660, %v779
        %781 = vst [vmem:[%s753 + $0x2c] sm:$0x1] %v780
        %v782 = vld [vmem:[%s753 + $0x30] sm:$0xf]
        %v783 = vsel %vm540, %v667, %v782
        %784 = vst [vmem:[%s753 + $0x30] sm:$0xf] %v783
        %785 = vst.msk [vmem:[%s753 + $0x34] sm:$0xf] %vm544, %v676
        %v786 = vld [vmem:[%s753 + $0x38] sm:$0x1]
        %v787 = vsel %vm454, %v677, %v786
        %788 = vst [vmem:[%s753 + $0x38] sm:$0x1] %v787
        %v789 = vld [vmem:[%s753 + $0x3c] sm:$0xf]
        %v790 = vsel %vm540, %v684, %v789
        %791 = vst [vmem:[%s753 + $0x3c] sm:$0xf] %v790
        %792 = vst.msk [vmem:[%s753 + $0x40] sm:$0xf] %vm544, %v693
        %v793 = vld [vmem:[%s753 + $0x44] sm:$0x1]
        %v794 = vsel %vm454, %v694, %v793
        %795 = vst [vmem:[%s753 + $0x44] sm:$0x1] %v794
        %v796 = vld [vmem:[%s753 + $0x48] sm:$0xf]
        %v797 = vsel %vm540, %v701, %v796
        %798 = vst [vmem:[%s753 + $0x48] sm:$0xf] %v797
        %799 = vst.msk [vmem:[%s753 + $0x4c] sm:$0xf] %vm544, %v710
        %v800 = vld [vmem:[%s753 + $0x50] sm:$0x1]
        %v801 = vsel %vm454, %v711, %v800
        %802 = vst [vmem:[%s753 + $0x50] sm:$0x1] %v801
        %v803 = vld [vmem:[%s753 + $0x54] sm:$0xf]
        %v804 = vsel %vm540, %v718, %v803
        %805 = vst [vmem:[%s753 + $0x54] sm:$0xf] %v804
        %806 = vst.msk [vmem:[%s753 + $0x58] sm:$0xf] %vm544, %v727
        %v807 = vld [vmem:[%s753 + $0x5c] sm:$0x1]
        %v808 = vsel %vm454, %v728, %v807
        %809 = vst [vmem:[%s753 + $0x5c] sm:$0x1] %v808
        %v810 = vld [vmem:[#allocation2] sm:$0xf]
        %v811 = vld [vmem:[#allocation2 + $0x4] sm:$0xf]
        %v812 = vld [vmem:[#allocation2 + $0xc] sm:$0xf]
        %v813 = vld [vmem:[#allocation2 + $0x10] sm:$0xf]
        %v814 = vld [vmem:[#allocation2 + $0x18] sm:$0xf]
        %v815 = vld [vmem:[#allocation2 + $0x1c] sm:$0xf]
        %v816 = vld [vmem:[#allocation2 + $0x24] sm:$0xf]
        %v817 = vld [vmem:[#allocation2 + $0x28] sm:$0xf]
        %v818 = vld [vmem:[#allocation2 + $0x30] sm:$0xf]
        %v819 = vld [vmem:[#allocation2 + $0x34] sm:$0xf]
        %v820 = vld [vmem:[#allocation2 + $0x3c] sm:$0xf]
        %v821 = vld [vmem:[#allocation2 + $0x40] sm:$0xf]
        %v822 = vld [vmem:[#allocation2 + $0x48] sm:$0xf]
        %v823 = vld [vmem:[#allocation2 + $0x4c] sm:$0xf]
        %v824 = vld [vmem:[#allocation2 + $0x54] sm:$0xf]
        %v825 = vld [vmem:[#allocation2 + $0x58] sm:$0xf]
        %v826 = vld [vmem:[#allocation2 + $0x8] sm:$0x1]
        %v827 = vld [vmem:[#allocation2 + $0x14] sm:$0x1]
        %v828 = vld [vmem:[#allocation2 + $0x20] sm:$0x1]
        %v829 = vld [vmem:[#allocation2 + $0x2c] sm:$0x1]
        %v830 = vld [vmem:[#allocation2 + $0x38] sm:$0x1]
        %v831 = vld [vmem:[#allocation2 + $0x44] sm:$0x1]
        %v832 = vld [vmem:[#allocation2 + $0x50] sm:$0x1]
        %v833 = vld [vmem:[#allocation2 + $0x5c] sm:$0x1]
        %v834 = vld [vmem:[#allocation2] sm:$0xe]
        %v835 = vld [vmem:[#allocation2 + $0xc] sm:$0xe]
        %v836 = vld [vmem:[#allocation2 + $0x18] sm:$0xe]
        %v837 = vld [vmem:[#allocation2 + $0x24] sm:$0xe]
        %v838 = vld [vmem:[#allocation2 + $0x30] sm:$0xe]
        %v839 = vld [vmem:[#allocation2 + $0x3c] sm:$0xe]
        %v840 = vld [vmem:[#allocation2 + $0x48] sm:$0xe]
        %v841 = vld [vmem:[#allocation2 + $0x54] sm:$0xe]
        %v842 = vld [vmem:[%s753] sm:$0xf]
        %v843 = vld [vmem:[%s753 + $0x4] sm:$0xf]
        %v844 = vld [vmem:[%s753 + $0xc] sm:$0xf]
        %v845 = vld [vmem:[%s753 + $0x10] sm:$0xf]
        %v846 = vld [vmem:[%s753 + $0x18] sm:$0xf]
        %v847 = vld [vmem:[%s753 + $0x1c] sm:$0xf]
        %v848 = vld [vmem:[%s753 + $0x24] sm:$0xf]
        %v849 = vld [vmem:[%s753 + $0x28] sm:$0xf]
        %v850 = vld [vmem:[%s753 + $0x30] sm:$0xf]
        %v851 = vld [vmem:[%s753 + $0x34] sm:$0xf]
        %v852 = vld [vmem:[%s753 + $0x3c] sm:$0xf]
        %v853 = vld [vmem:[%s753 + $0x40] sm:$0xf]
        %v854 = vld [vmem:[%s753 + $0x48] sm:$0xf]
        %v855 = vld [vmem:[%s753 + $0x4c] sm:$0xf]
        %v856 = vld [vmem:[%s753 + $0x54] sm:$0xf]
        %v857 = vld [vmem:[%s753 + $0x58] sm:$0xf]
        %v858 = vld [vmem:[%s753 + $0x8] sm:$0x1]
        %v859 = vld [vmem:[%s753 + $0x14] sm:$0x1]
        %v860 = vld [vmem:[%s753 + $0x20] sm:$0x1]
        %v861 = vld [vmem:[%s753 + $0x2c] sm:$0x1]
        %v862 = vld [vmem:[%s753 + $0x38] sm:$0x1]
        %v863 = vld [vmem:[%s753 + $0x44] sm:$0x1]
        %v864 = vld [vmem:[%s753 + $0x50] sm:$0x1]
        %v865 = vld [vmem:[%s753 + $0x5c] sm:$0x1]
        %v866 = vld [vmem:[%s753] sm:$0xe]
        %v867 = vld [vmem:[%s753 + $0xc] sm:$0xe]
        %v868 = vld [vmem:[%s753 + $0x18] sm:$0xe]
        %v869 = vld [vmem:[%s753 + $0x24] sm:$0xe]
        %v870 = vld [vmem:[%s753 + $0x30] sm:$0xe]
        %v871 = vld [vmem:[%s753 + $0x3c] sm:$0xe]
        %v872 = vld [vmem:[%s753 + $0x48] sm:$0xe]
        %v873 = vld [vmem:[%s753 + $0x54] sm:$0xe]
        %s874 = scalar_lea.vmem [#allocation2], 24
        %v875 = vld [vmem:[%s874] sm:$0xf]
        %v876 = vld [vmem:[%s874 + $0x4] sm:$0xf]
        %v877 = vld [vmem:[%s874 + $0xc] sm:$0xf]
        %v878 = vld [vmem:[%s874 + $0x10] sm:$0xf]
        %v879 = vld [vmem:[%s874 + $0x18] sm:$0xf]
        %v880 = vld [vmem:[%s874 + $0x1c] sm:$0xf]
        %v881 = vld [vmem:[%s874 + $0x24] sm:$0xf]
        %v882 = vld [vmem:[%s874 + $0x28] sm:$0xf]
        %v883 = vld [vmem:[%s874 + $0x30] sm:$0xf]
        %v884 = vld [vmem:[%s874 + $0x34] sm:$0xf]
        %v885 = vld [vmem:[%s874 + $0x3c] sm:$0xf]
        %v886 = vld [vmem:[%s874 + $0x40] sm:$0xf]
        %v887 = vld [vmem:[%s874 + $0x48] sm:$0xf]
        %v888 = vld [vmem:[%s874 + $0x4c] sm:$0xf]
        %v889 = vld [vmem:[%s874 + $0x54] sm:$0xf]
        %v890 = vld [vmem:[%s874 + $0x58] sm:$0xf]
        %v891 = vld [vmem:[%s874 + $0x8] sm:$0x1]
        %v892 = vld [vmem:[%s874 + $0x14] sm:$0x1]
        %v893 = vld [vmem:[%s874 + $0x20] sm:$0x1]
        %v894 = vld [vmem:[%s874 + $0x2c] sm:$0x1]
        %v895 = vld [vmem:[%s874 + $0x38] sm:$0x1]
        %v896 = vld [vmem:[%s874 + $0x44] sm:$0x1]
        %v897 = vld [vmem:[%s874 + $0x50] sm:$0x1]
        %v898 = vld [vmem:[%s874 + $0x5c] sm:$0x1]
        %v899 = vld [vmem:[%s874] sm:$0xe]
        %v900 = vld [vmem:[%s874 + $0xc] sm:$0xe]
        %v901 = vld [vmem:[%s874 + $0x18] sm:$0xe]
        %v902 = vld [vmem:[%s874 + $0x24] sm:$0xe]
        %v903 = vld [vmem:[%s874 + $0x30] sm:$0xe]
        %v904 = vld [vmem:[%s874 + $0x3c] sm:$0xe]
        %v905 = vld [vmem:[%s874 + $0x48] sm:$0xe]
        %v906 = vld [vmem:[%s874 + $0x54] sm:$0xe]
        %v923 = vunpack.c.l.b16 %v810
        %v924 = vunpack.c.l.b16 %v811
        %v925 = vunpack.c.l.b16 %v812
        %v926 = vunpack.c.l.b16 %v813
        %v927 = vunpack.c.l.b16 %v814
        %v928 = vunpack.c.l.b16 %v815
        %v929 = vunpack.c.l.b16 %v816
        %v930 = vunpack.c.l.b16 %v817
        %v931 = vunpack.c.l.b16 %v818
        %v932 = vunpack.c.l.b16 %v819
        %v933 = vunpack.c.l.b16 %v820
        %v934 = vunpack.c.l.b16 %v821
        %v935 = vunpack.c.l.b16 %v822
        %v936 = vunpack.c.l.b16 %v823
        %v937 = vunpack.c.l.b16 %v824
        %v938 = vunpack.c.l.b16 %v825
        %v939 = vpack.c.b16 %v924, %v923
        %v940 = vpack.c.b16 %v926, %v925
        %v941 = vpack.c.b16 %v928, %v927
        %v942 = vpack.c.b16 %v930, %v929
        %v943 = vpack.c.b16 %v932, %v931
        %v944 = vpack.c.b16 %v934, %v933
        %v945 = vpack.c.b16 %v936, %v935
        %v946 = vpack.c.b16 %v938, %v937
        %v955 = vunpack.c.l.b16 %v826
        %v956 = vunpack.c.l.b16 %v827
        %v957 = vunpack.c.l.b16 %v828
        %v958 = vunpack.c.l.b16 %v829
        %v959 = vunpack.c.l.b16 %v830
        %v960 = vunpack.c.l.b16 %v831
        %v961 = vunpack.c.l.b16 %v832
        %v962 = vunpack.c.l.b16 %v833
        %v963 = vpack.c.b16 %v955, %v955
        %v964 = vpack.c.b16 %v956, %v956
        %v965 = vpack.c.b16 %v957, %v957
        %v966 = vpack.c.b16 %v958, %v958
        %v967 = vpack.c.b16 %v959, %v959
        %v968 = vpack.c.b16 %v960, %v960
        %v969 = vpack.c.b16 %v961, %v961
        %v970 = vpack.c.b16 %v962, %v962
        %vm971 = vsmask.f32 7424
        %v973 = vshrl.u32 %v939, 16
        %v975 = vshll.u32 %v939, 16
        %v977 = vrot.slane %v975, 1
        %v978 = vor.u32 %v973, %v977
        %v980 = vshll.u32 %v963, 16
        %v982 = vrot.slane %v980, 1
        %v983 = vsel %vm971, %v978, %v982
        %v985 = vshrl.u32 %v940, 16
        %v987 = vshll.u32 %v940, 16
        %v989 = vrot.slane %v987, 1
        %v990 = vor.u32 %v985, %v989
        %v992 = vshll.u32 %v964, 16
        %v994 = vrot.slane %v992, 1
        %v995 = vsel %vm971, %v990, %v994
        %v997 = vshrl.u32 %v941, 16
        %v999 = vshll.u32 %v941, 16
        %v1001 = vrot.slane %v999, 1
        %v1002 = vor.u32 %v997, %v1001
        %v1004 = vshll.u32 %v965, 16
        %v1006 = vrot.slane %v1004, 1
        %v1007 = vsel %vm971, %v1002, %v1006
        %v1009 = vshrl.u32 %v942, 16
        %v1011 = vshll.u32 %v942, 16
        %v1013 = vrot.slane %v1011, 1
        %v1014 = vor.u32 %v1009, %v1013
        %v1016 = vshll.u32 %v966, 16
        %v1018 = vrot.slane %v1016, 1
        %v1019 = vsel %vm971, %v1014, %v1018
        %v1021 = vshrl.u32 %v943, 16
        %v1023 = vshll.u32 %v943, 16
        %v1025 = vrot.slane %v1023, 1
        %v1026 = vor.u32 %v1021, %v1025
        %v1028 = vshll.u32 %v967, 16
        %v1030 = vrot.slane %v1028, 1
        %v1031 = vsel %vm971, %v1026, %v1030
        %v1033 = vshrl.u32 %v944, 16
        %v1035 = vshll.u32 %v944, 16
        %v1037 = vrot.slane %v1035, 1
        %v1038 = vor.u32 %v1033, %v1037
        %v1040 = vshll.u32 %v968, 16
        %v1042 = vrot.slane %v1040, 1
        %v1043 = vsel %vm971, %v1038, %v1042
        %v1045 = vshrl.u32 %v945, 16
        %v1047 = vshll.u32 %v945, 16
        %v1049 = vrot.slane %v1047, 1
        %v1050 = vor.u32 %v1045, %v1049
        %v1052 = vshll.u32 %v969, 16
        %v1054 = vrot.slane %v1052, 1
        %v1055 = vsel %vm971, %v1050, %v1054
        %v1057 = vshrl.u32 %v946, 16
        %v1059 = vshll.u32 %v946, 16
        %v1061 = vrot.slane %v1059, 1
        %v1062 = vor.u32 %v1057, %v1061
        %v1064 = vshll.u32 %v970, 16
        %v1066 = vrot.slane %v1064, 1
        %v1067 = vsel %vm971, %v1062, %v1066
        %1068 = vrot.lane.b32.xlu0 %v983, 16
        %v1069 = vpop.permute.xlu0 %1068
        %1070 = vrot.lane.b32.xlu0 %v995, 16
        %v1071 = vpop.permute.xlu0 %1070
        %1072 = vrot.lane.b32.xlu0 %v1007, 16
        %v1073 = vpop.permute.xlu0 %1072
        %1074 = vrot.lane.b32.xlu0 %v1019, 16
        %v1075 = vpop.permute.xlu0 %1074
        %1076 = vrot.lane.b32.xlu0 %v1031, 16
        %v1077 = vpop.permute.xlu0 %1076
        %1078 = vrot.lane.b32.xlu0 %v1043, 16
        %v1079 = vpop.permute.xlu0 %1078
        %1080 = vrot.lane.b32.xlu0 %v1055, 16
        %v1081 = vpop.permute.xlu0 %1080
        %1082 = vrot.lane.b32.xlu0 %v1067, 16
        %v1083 = vpop.permute.xlu0 %1082
        %v1092 = vunpack.c.l.b16 %v834
        %v1093 = vunpack.c.l.b16 %v835
        %v1094 = vunpack.c.l.b16 %v836
        %v1095 = vunpack.c.l.b16 %v837
        %v1096 = vunpack.c.l.b16 %v838
        %v1097 = vunpack.c.l.b16 %v839
        %v1098 = vunpack.c.l.b16 %v840
        %v1099 = vunpack.c.l.b16 %v841
        %v1100 = vpack.c.b16 %v924, %v1092
        %v1101 = vpack.c.b16 %v926, %v1093
        %v1102 = vpack.c.b16 %v928, %v1094
        %v1103 = vpack.c.b16 %v930, %v1095
        %v1104 = vpack.c.b16 %v932, %v1096
        %v1105 = vpack.c.b16 %v934, %v1097
        %v1106 = vpack.c.b16 %v936, %v1098
        %v1107 = vpack.c.b16 %v938, %v1099
        %vm1108 = vcmask 1046528
        %v1109 = vrot.slane %v1100, 1
        %v1110 = vrot.slane %v963, 1
        %v1111 = vsel %vm1108, %v1109, %v1110
        %v1112 = vrot.slane %v1101, 1
        %v1113 = vrot.slane %v964, 1
        %v1114 = vsel %vm1108, %v1112, %v1113
        %v1115 = vrot.slane %v1102, 1
        %v1116 = vrot.slane %v965, 1
        %v1117 = vsel %vm1108, %v1115, %v1116
        %v1118 = vrot.slane %v1103, 1
        %v1119 = vrot.slane %v966, 1
        %v1120 = vsel %vm1108, %v1118, %v1119
        %v1121 = vrot.slane %v1104, 1
        %v1122 = vrot.slane %v967, 1
        %v1123 = vsel %vm1108, %v1121, %v1122
        %v1124 = vrot.slane %v1105, 1
        %v1125 = vrot.slane %v968, 1
        %v1126 = vsel %vm1108, %v1124, %v1125
        %v1127 = vrot.slane %v1106, 1
        %v1128 = vrot.slane %v969, 1
        %v1129 = vsel %vm1108, %v1127, %v1128
        %v1130 = vrot.slane %v1107, 1
        %v1131 = vrot.slane %v970, 1
        %v1132 = vsel %vm1108, %v1130, %v1131
        %1133 = vrot.lane.b32.xlu0 %v1111, 32
        %v1134 = vpop.permute.xlu0 %1133
        %1135 = vrot.lane.b32.xlu0 %v1114, 32
        %v1136 = vpop.permute.xlu0 %1135
        %1137 = vrot.lane.b32.xlu0 %v1117, 32
        %v1138 = vpop.permute.xlu0 %1137
        %1139 = vrot.lane.b32.xlu0 %v1120, 32
        %v1140 = vpop.permute.xlu0 %1139
        %1141 = vrot.lane.b32.xlu0 %v1123, 32
        %v1142 = vpop.permute.xlu0 %1141
        %1143 = vrot.lane.b32.xlu0 %v1126, 32
        %v1144 = vpop.permute.xlu0 %1143
        %1145 = vrot.lane.b32.xlu0 %v1129, 32
        %v1146 = vpop.permute.xlu0 %1145
        %1147 = vrot.lane.b32.xlu0 %v1132, 32
        %v1148 = vpop.permute.xlu0 %1147
        %v1165 = vunpack.c.l.b16 %v842
        %v1166 = vunpack.c.l.b16 %v843
        %v1167 = vunpack.c.l.b16 %v844
        %v1168 = vunpack.c.l.b16 %v845
        %v1169 = vunpack.c.l.b16 %v846
        %v1170 = vunpack.c.l.b16 %v847
        %v1171 = vunpack.c.l.b16 %v848
        %v1172 = vunpack.c.l.b16 %v849
        %v1173 = vunpack.c.l.b16 %v850
        %v1174 = vunpack.c.l.b16 %v851
        %v1175 = vunpack.c.l.b16 %v852
        %v1176 = vunpack.c.l.b16 %v853
        %v1177 = vunpack.c.l.b16 %v854
        %v1178 = vunpack.c.l.b16 %v855
        %v1179 = vunpack.c.l.b16 %v856
        %v1180 = vunpack.c.l.b16 %v857
        %v1181 = vpack.c.b16 %v1166, %v1165
        %v1182 = vpack.c.b16 %v1168, %v1167
        %v1183 = vpack.c.b16 %v1170, %v1169
        %v1184 = vpack.c.b16 %v1172, %v1171
        %v1185 = vpack.c.b16 %v1174, %v1173
        %v1186 = vpack.c.b16 %v1176, %v1175
        %v1187 = vpack.c.b16 %v1178, %v1177
        %v1188 = vpack.c.b16 %v1180, %v1179
        %1189 = vrot.lane.b32.xlu0 %v1181, 48
        %v1190 = vpop.permute.xlu0 %1189
        %1191 = vrot.lane.b32.xlu0 %v1182, 48
        %v1192 = vpop.permute.xlu0 %1191
        %1193 = vrot.lane.b32.xlu0 %v1183, 48
        %v1194 = vpop.permute.xlu0 %1193
        %1195 = vrot.lane.b32.xlu0 %v1184, 48
        %v1196 = vpop.permute.xlu0 %1195
        %1197 = vrot.lane.b32.xlu0 %v1185, 48
        %v1198 = vpop.permute.xlu0 %1197
        %1199 = vrot.lane.b32.xlu0 %v1186, 48
        %v1200 = vpop.permute.xlu0 %1199
        %1201 = vrot.lane.b32.xlu0 %v1187, 48
        %v1202 = vpop.permute.xlu0 %1201
        %1203 = vrot.lane.b32.xlu0 %v1188, 48
        %v1204 = vpop.permute.xlu0 %1203
        %v1213 = vunpack.c.l.b16 %v858
        %v1214 = vunpack.c.l.b16 %v859
        %v1215 = vunpack.c.l.b16 %v860
        %v1216 = vunpack.c.l.b16 %v861
        %v1217 = vunpack.c.l.b16 %v862
        %v1218 = vunpack.c.l.b16 %v863
        %v1219 = vunpack.c.l.b16 %v864
        %v1220 = vunpack.c.l.b16 %v865
        %v1221 = vpack.c.b16 %v1213, %v1213
        %v1222 = vpack.c.b16 %v1214, %v1214
        %v1223 = vpack.c.b16 %v1215, %v1215
        %v1224 = vpack.c.b16 %v1216, %v1216
        %v1225 = vpack.c.b16 %v1217, %v1217
        %v1226 = vpack.c.b16 %v1218, %v1218
        %v1227 = vpack.c.b16 %v1219, %v1219
        %v1228 = vpack.c.b16 %v1220, %v1220
        %v1230 = vshrl.u32 %v1181, 16
        %v1232 = vshll.u32 %v1181, 16
        %v1234 = vrot.slane %v1232, 1
        %v1235 = vor.u32 %v1230, %v1234
        %v1237 = vshll.u32 %v1221, 16
        %v1239 = vrot.slane %v1237, 1
        %v1240 = vsel %vm971, %v1235, %v1239
        %v1242 = vshrl.u32 %v1182, 16
        %v1244 = vshll.u32 %v1182, 16
        %v1246 = vrot.slane %v1244, 1
        %v1247 = vor.u32 %v1242, %v1246
        %v1249 = vshll.u32 %v1222, 16
        %v1251 = vrot.slane %v1249, 1
        %v1252 = vsel %vm971, %v1247, %v1251
        %v1254 = vshrl.u32 %v1183, 16
        %v1256 = vshll.u32 %v1183, 16
        %v1258 = vrot.slane %v1256, 1
        %v1259 = vor.u32 %v1254, %v1258
        %v1261 = vshll.u32 %v1223, 16
        %v1263 = vrot.slane %v1261, 1
        %v1264 = vsel %vm971, %v1259, %v1263
        %v1266 = vshrl.u32 %v1184, 16
        %v1268 = vshll.u32 %v1184, 16
        %v1270 = vrot.slane %v1268, 1
        %v1271 = vor.u32 %v1266, %v1270
        %v1273 = vshll.u32 %v1224, 16
        %v1275 = vrot.slane %v1273, 1
        %v1276 = vsel %vm971, %v1271, %v1275
        %v1278 = vshrl.u32 %v1185, 16
        %v1280 = vshll.u32 %v1185, 16
        %v1282 = vrot.slane %v1280, 1
        %v1283 = vor.u32 %v1278, %v1282
        %v1285 = vshll.u32 %v1225, 16
        %v1287 = vrot.slane %v1285, 1
        %v1288 = vsel %vm971, %v1283, %v1287
        %v1290 = vshrl.u32 %v1186, 16
        %v1292 = vshll.u32 %v1186, 16
        %v1294 = vrot.slane %v1292, 1
        %v1295 = vor.u32 %v1290, %v1294
        %v1297 = vshll.u32 %v1226, 16
        %v1299 = vrot.slane %v1297, 1
        %v1300 = vsel %vm971, %v1295, %v1299
        %v1302 = vshrl.u32 %v1187, 16
        %v1304 = vshll.u32 %v1187, 16
        %v1306 = vrot.slane %v1304, 1
        %v1307 = vor.u32 %v1302, %v1306
        %v1309 = vshll.u32 %v1227, 16
        %v1311 = vrot.slane %v1309, 1
        %v1312 = vsel %vm971, %v1307, %v1311
        %v1314 = vshrl.u32 %v1188, 16
        %v1316 = vshll.u32 %v1188, 16
        %v1318 = vrot.slane %v1316, 1
        %v1319 = vor.u32 %v1314, %v1318
        %v1321 = vshll.u32 %v1228, 16
        %v1323 = vrot.slane %v1321, 1
        %v1324 = vsel %vm971, %v1319, %v1323
        %1325 = vrot.lane.b32.xlu0 %v1240, 64
        %v1326 = vpop.permute.xlu0 %1325
        %1327 = vrot.lane.b32.xlu0 %v1252, 64
        %v1328 = vpop.permute.xlu0 %1327
        %1329 = vrot.lane.b32.xlu0 %v1264, 64
        %v1330 = vpop.permute.xlu0 %1329
        %1331 = vrot.lane.b32.xlu0 %v1276, 64
        %v1332 = vpop.permute.xlu0 %1331
        %1333 = vrot.lane.b32.xlu0 %v1288, 64
        %v1334 = vpop.permute.xlu0 %1333
        %1335 = vrot.lane.b32.xlu0 %v1300, 64
        %v1336 = vpop.permute.xlu0 %1335
        %1337 = vrot.lane.b32.xlu0 %v1312, 64
        %v1338 = vpop.permute.xlu0 %1337
        %1339 = vrot.lane.b32.xlu0 %v1324, 64
        %v1340 = vpop.permute.xlu0 %1339
        %v1349 = vunpack.c.l.b16 %v866
        %v1350 = vunpack.c.l.b16 %v867
        %v1351 = vunpack.c.l.b16 %v868
        %v1352 = vunpack.c.l.b16 %v869
        %v1353 = vunpack.c.l.b16 %v870
        %v1354 = vunpack.c.l.b16 %v871
        %v1355 = vunpack.c.l.b16 %v872
        %v1356 = vunpack.c.l.b16 %v873
        %v1357 = vpack.c.b16 %v1166, %v1349
        %v1358 = vpack.c.b16 %v1168, %v1350
        %v1359 = vpack.c.b16 %v1170, %v1351
        %v1360 = vpack.c.b16 %v1172, %v1352
        %v1361 = vpack.c.b16 %v1174, %v1353
        %v1362 = vpack.c.b16 %v1176, %v1354
        %v1363 = vpack.c.b16 %v1178, %v1355
        %v1364 = vpack.c.b16 %v1180, %v1356
        %v1365 = vrot.slane %v1357, 1
        %v1366 = vrot.slane %v1221, 1
        %v1367 = vsel %vm1108, %v1365, %v1366
        %v1368 = vrot.slane %v1358, 1
        %v1369 = vrot.slane %v1222, 1
        %v1370 = vsel %vm1108, %v1368, %v1369
        %v1371 = vrot.slane %v1359, 1
        %v1372 = vrot.slane %v1223, 1
        %v1373 = vsel %vm1108, %v1371, %v1372
        %v1374 = vrot.slane %v1360, 1
        %v1375 = vrot.slane %v1224, 1
        %v1376 = vsel %vm1108, %v1374, %v1375
        %v1377 = vrot.slane %v1361, 1
        %v1378 = vrot.slane %v1225, 1
        %v1379 = vsel %vm1108, %v1377, %v1378
        %v1380 = vrot.slane %v1362, 1
        %v1381 = vrot.slane %v1226, 1
        %v1382 = vsel %vm1108, %v1380, %v1381
        %v1383 = vrot.slane %v1363, 1
        %v1384 = vrot.slane %v1227, 1
        %v1385 = vsel %vm1108, %v1383, %v1384
        %v1386 = vrot.slane %v1364, 1
        %v1387 = vrot.slane %v1228, 1
        %v1388 = vsel %vm1108, %v1386, %v1387
        %1389 = vrot.lane.b32.xlu0 %v1367, 80
        %v1390 = vpop.permute.xlu0 %1389
        %1391 = vrot.lane.b32.xlu0 %v1370, 80
        %v1392 = vpop.permute.xlu0 %1391
        %1393 = vrot.lane.b32.xlu0 %v1373, 80
        %v1394 = vpop.permute.xlu0 %1393
        %1395 = vrot.lane.b32.xlu0 %v1376, 80
        %v1396 = vpop.permute.xlu0 %1395
        %1397 = vrot.lane.b32.xlu0 %v1379, 80
        %v1398 = vpop.permute.xlu0 %1397
        %1399 = vrot.lane.b32.xlu0 %v1382, 80
        %v1400 = vpop.permute.xlu0 %1399
        %1401 = vrot.lane.b32.xlu0 %v1385, 80
        %v1402 = vpop.permute.xlu0 %1401
        %1403 = vrot.lane.b32.xlu0 %v1388, 80
        %v1404 = vpop.permute.xlu0 %1403
        %v1421 = vunpack.c.l.b16 %v875
        %v1422 = vunpack.c.l.b16 %v876
        %v1423 = vunpack.c.l.b16 %v877
        %v1424 = vunpack.c.l.b16 %v878
        %v1425 = vunpack.c.l.b16 %v879
        %v1426 = vunpack.c.l.b16 %v880
        %v1427 = vunpack.c.l.b16 %v881
        %v1428 = vunpack.c.l.b16 %v882
        %v1429 = vunpack.c.l.b16 %v883
        %v1430 = vunpack.c.l.b16 %v884
        %v1431 = vunpack.c.l.b16 %v885
        %v1432 = vunpack.c.l.b16 %v886
        %v1433 = vunpack.c.l.b16 %v887
        %v1434 = vunpack.c.l.b16 %v888
        %v1435 = vunpack.c.l.b16 %v889
        %v1436 = vunpack.c.l.b16 %v890
        %v1437 = vpack.c.b16 %v1422, %v1421
        %v1438 = vpack.c.b16 %v1424, %v1423
        %v1439 = vpack.c.b16 %v1426, %v1425
        %v1440 = vpack.c.b16 %v1428, %v1427
        %v1441 = vpack.c.b16 %v1430, %v1429
        %v1442 = vpack.c.b16 %v1432, %v1431
        %v1443 = vpack.c.b16 %v1434, %v1433
        %v1444 = vpack.c.b16 %v1436, %v1435
        %1445 = vrot.lane.b32.xlu0 %v1437, 96
        %v1446 = vpop.permute.xlu0 %1445
        %1447 = vrot.lane.b32.xlu0 %v1438, 96
        %v1448 = vpop.permute.xlu0 %1447
        %1449 = vrot.lane.b32.xlu0 %v1439, 96
        %v1450 = vpop.permute.xlu0 %1449
        %1451 = vrot.lane.b32.xlu0 %v1440, 96
        %v1452 = vpop.permute.xlu0 %1451
        %1453 = vrot.lane.b32.xlu0 %v1441, 96
        %v1454 = vpop.permute.xlu0 %1453
        %1455 = vrot.lane.b32.xlu0 %v1442, 96
        %v1456 = vpop.permute.xlu0 %1455
        %1457 = vrot.lane.b32.xlu0 %v1443, 96
        %v1458 = vpop.permute.xlu0 %1457
        %1459 = vrot.lane.b32.xlu0 %v1444, 96
        %v1460 = vpop.permute.xlu0 %1459
        %v1469 = vunpack.c.l.b16 %v891
        %v1470 = vunpack.c.l.b16 %v892
        %v1471 = vunpack.c.l.b16 %v893
        %v1472 = vunpack.c.l.b16 %v894
        %v1473 = vunpack.c.l.b16 %v895
        %v1474 = vunpack.c.l.b16 %v896
        %v1475 = vunpack.c.l.b16 %v897
        %v1476 = vunpack.c.l.b16 %v898
        %v1477 = vpack.c.b16 %v1469, %v1469
        %v1478 = vpack.c.b16 %v1470, %v1470
        %v1479 = vpack.c.b16 %v1471, %v1471
        %v1480 = vpack.c.b16 %v1472, %v1472
        %v1481 = vpack.c.b16 %v1473, %v1473
        %v1482 = vpack.c.b16 %v1474, %v1474
        %v1483 = vpack.c.b16 %v1475, %v1475
        %v1484 = vpack.c.b16 %v1476, %v1476
        %v1486 = vshrl.u32 %v1437, 16
        %v1488 = vshll.u32 %v1437, 16
        %v1490 = vrot.slane %v1488, 1
        %v1491 = vor.u32 %v1486, %v1490
        %v1493 = vshll.u32 %v1477, 16
        %v1495 = vrot.slane %v1493, 1
        %v1496 = vsel %vm971, %v1491, %v1495
        %v1498 = vshrl.u32 %v1438, 16
        %v1500 = vshll.u32 %v1438, 16
        %v1502 = vrot.slane %v1500, 1
        %v1503 = vor.u32 %v1498, %v1502
        %v1505 = vshll.u32 %v1478, 16
        %v1507 = vrot.slane %v1505, 1
        %v1508 = vsel %vm971, %v1503, %v1507
        %v1510 = vshrl.u32 %v1439, 16
        %v1512 = vshll.u32 %v1439, 16
        %v1514 = vrot.slane %v1512, 1
        %v1515 = vor.u32 %v1510, %v1514
        %v1517 = vshll.u32 %v1479, 16
        %v1519 = vrot.slane %v1517, 1
        %v1520 = vsel %vm971, %v1515, %v1519
        %v1522 = vshrl.u32 %v1440, 16
        %v1524 = vshll.u32 %v1440, 16
        %v1526 = vrot.slane %v1524, 1
        %v1527 = vor.u32 %v1522, %v1526
        %v1529 = vshll.u32 %v1480, 16
        %v1531 = vrot.slane %v1529, 1
        %v1532 = vsel %vm971, %v1527, %v1531
        %v1534 = vshrl.u32 %v1441, 16
        %v1536 = vshll.u32 %v1441, 16
        %v1538 = vrot.slane %v1536, 1
        %v1539 = vor.u32 %v1534, %v1538
        %v1541 = vshll.u32 %v1481, 16
        %v1543 = vrot.slane %v1541, 1
        %v1544 = vsel %vm971, %v1539, %v1543
        %v1546 = vshrl.u32 %v1442, 16
        %v1548 = vshll.u32 %v1442, 16
        %v1550 = vrot.slane %v1548, 1
        %v1551 = vor.u32 %v1546, %v1550
        %v1553 = vshll.u32 %v1482, 16
        %v1555 = vrot.slane %v1553, 1
        %v1556 = vsel %vm971, %v1551, %v1555
        %v1558 = vshrl.u32 %v1443, 16
        %v1560 = vshll.u32 %v1443, 16
        %v1562 = vrot.slane %v1560, 1
        %v1563 = vor.u32 %v1558, %v1562
        %v1565 = vshll.u32 %v1483, 16
        %v1567 = vrot.slane %v1565, 1
        %v1568 = vsel %vm971, %v1563, %v1567
        %v1570 = vshrl.u32 %v1444, 16
        %v1572 = vshll.u32 %v1444, 16
        %v1574 = vrot.slane %v1572, 1
        %v1575 = vor.u32 %v1570, %v1574
        %v1577 = vshll.u32 %v1484, 16
        %v1579 = vrot.slane %v1577, 1
        %v1580 = vsel %vm971, %v1575, %v1579
        %1581 = vrot.lane.b32.xlu0 %v1496, 112
        %v1582 = vpop.permute.xlu0 %1581
        %1583 = vrot.lane.b32.xlu0 %v1508, 112
        %v1584 = vpop.permute.xlu0 %1583
        %1585 = vrot.lane.b32.xlu0 %v1520, 112
        %v1586 = vpop.permute.xlu0 %1585
        %1587 = vrot.lane.b32.xlu0 %v1532, 112
        %v1588 = vpop.permute.xlu0 %1587
        %1589 = vrot.lane.b32.xlu0 %v1544, 112
        %v1590 = vpop.permute.xlu0 %1589
        %1591 = vrot.lane.b32.xlu0 %v1556, 112
        %v1592 = vpop.permute.xlu0 %1591
        %1593 = vrot.lane.b32.xlu0 %v1568, 112
        %v1594 = vpop.permute.xlu0 %1593
        %1595 = vrot.lane.b32.xlu0 %v1580, 112
        %v1596 = vpop.permute.xlu0 %1595
        %v1605 = vunpack.c.l.b16 %v899
        %v1606 = vunpack.c.l.b16 %v900
        %v1607 = vunpack.c.l.b16 %v901
        %v1608 = vunpack.c.l.b16 %v902
        %v1609 = vunpack.c.l.b16 %v903
        %v1610 = vunpack.c.l.b16 %v904
        %v1611 = vunpack.c.l.b16 %v905
        %v1612 = vunpack.c.l.b16 %v906
        %v1613 = vpack.c.b16 %v1422, %v1605
        %v1614 = vpack.c.b16 %v1424, %v1606
        %v1615 = vpack.c.b16 %v1426, %v1607
        %v1616 = vpack.c.b16 %v1428, %v1608
        %v1617 = vpack.c.b16 %v1430, %v1609
        %v1618 = vpack.c.b16 %v1432, %v1610
        %v1619 = vpack.c.b16 %v1434, %v1611
        %v1620 = vpack.c.b16 %v1436, %v1612
        %v1621 = vrot.slane %v1613, 1
        %v1622 = vrot.slane %v1477, 1
        %v1623 = vsel %vm1108, %v1621, %v1622
        %v1624 = vrot.slane %v1614, 1
        %v1625 = vrot.slane %v1478, 1
        %v1626 = vsel %vm1108, %v1624, %v1625
        %v1627 = vrot.slane %v1615, 1
        %v1628 = vrot.slane %v1479, 1
        %v1629 = vsel %vm1108, %v1627, %v1628
        %v1630 = vrot.slane %v1616, 1
        %v1631 = vrot.slane %v1480, 1
        %v1632 = vsel %vm1108, %v1630, %v1631
        %v1633 = vrot.slane %v1617, 1
        %v1634 = vrot.slane %v1481, 1
        %v1635 = vsel %vm1108, %v1633, %v1634
        %v1636 = vrot.slane %v1618, 1
        %v1637 = vrot.slane %v1482, 1
        %v1638 = vsel %vm1108, %v1636, %v1637
        %v1639 = vrot.slane %v1619, 1
        %v1640 = vrot.slane %v1483, 1
        %v1641 = vsel %vm1108, %v1639, %v1640
        %v1642 = vrot.slane %v1620, 1
        %v1643 = vrot.slane %v1484, 1
        %v1644 = vsel %vm1108, %v1642, %v1643
        %vm1645 = vcmask 130048
        %v1647 = vsel %vm1645, %v939, %v1069
        %v1649 = vsel %vm1645, %v940, %v1071
        %v1651 = vsel %vm1645, %v941, %v1073
        %v1653 = vsel %vm1645, %v942, %v1075
        %v1655 = vsel %vm1645, %v943, %v1077
        %v1657 = vsel %vm1645, %v944, %v1079
        %v1659 = vsel %vm1645, %v945, %v1081
        %v1661 = vsel %vm1645, %v946, %v1083
        %vm1662 = vcmask 261120
        %v1664 = vsel %vm1662, %v1647, %v1134
        %v1666 = vsel %vm1662, %v1649, %v1136
        %v1668 = vsel %vm1662, %v1651, %v1138
        %v1670 = vsel %vm1662, %v1653, %v1140
        %v1672 = vsel %vm1662, %v1655, %v1142
        %v1674 = vsel %vm1662, %v1657, %v1144
        %v1676 = vsel %vm1662, %v1659, %v1146
        %v1678 = vsel %vm1662, %v1661, %v1148
        %vm1679 = vcmask 392192
        %v1681 = vsel %vm1679, %v1664, %v1190
        %v1683 = vsel %vm1679, %v1666, %v1192
        %v1685 = vsel %vm1679, %v1668, %v1194
        %v1687 = vsel %vm1679, %v1670, %v1196
        %v1689 = vsel %vm1679, %v1672, %v1198
        %v1691 = vsel %vm1679, %v1674, %v1200
        %v1693 = vsel %vm1679, %v1676, %v1202
        %v1695 = vsel %vm1679, %v1678, %v1204
        %vm1696 = vcmask 523264
        %v1698 = vsel %vm1696, %v1681, %v1326
        %v1700 = vsel %vm1696, %v1683, %v1328
        %v1702 = vsel %vm1696, %v1685, %v1330
        %v1704 = vsel %vm1696, %v1687, %v1332
        %v1706 = vsel %vm1696, %v1689, %v1334
        %v1708 = vsel %vm1696, %v1691, %v1336
        %v1710 = vsel %vm1696, %v1693, %v1338
        %v1712 = vsel %vm1696, %v1695, %v1340
        %vm1713 = vcmask 654336
        %v1715 = vsel %vm1713, %v1698, %v1390
        %v1717 = vsel %vm1713, %v1700, %v1392
        %v1719 = vsel %vm1713, %v1702, %v1394
        %v1721 = vsel %vm1713, %v1704, %v1396
        %v1723 = vsel %vm1713, %v1706, %v1398
        %v1725 = vsel %vm1713, %v1708, %v1400
        %v1727 = vsel %vm1713, %v1710, %v1402
        %v1729 = vsel %vm1713, %v1712, %v1404
        %vm1730 = vcmask 785408
        %v1732 = vsel %vm1730, %v1715, %v1446
        %v1734 = vsel %vm1730, %v1717, %v1448
        %v1736 = vsel %vm1730, %v1719, %v1450
        %v1738 = vsel %vm1730, %v1721, %v1452
        %v1740 = vsel %vm1730, %v1723, %v1454
        %v1742 = vsel %vm1730, %v1725, %v1456
        %v1744 = vsel %vm1730, %v1727, %v1458
        %v1746 = vsel %vm1730, %v1729, %v1460
        %vm1747 = vcmask 916480
        %v1749 = vsel %vm1747, %v1732, %v1582
        %v1752 = vsel %vm1747, %v1734, %v1584
        %v1755 = vsel %vm1747, %v1736, %v1586
        %v1758 = vsel %vm1747, %v1738, %v1588
        %v1761 = vsel %vm1747, %v1740, %v1590
        %v1764 = vsel %vm1747, %v1742, %v1592
        %v1767 = vsel %vm1747, %v1744, %v1594
        %v1770 = vsel %vm1747, %v1746, %v1596
        %v1772 = vld [vmem:[%s3] sm:$0xf]
        %v1773 = vld [vmem:[%s3 + $0x4] sm:$0xf]
        %v1774 = vld [vmem:[%s3 + $0x8] sm:$0xf]
        %v1775 = vld [vmem:[%s3 + $0xc] sm:$0xf]
        %v1776 = vld [vmem:[%s3 + $0x10] sm:$0xf]
        %v1777 = vld [vmem:[%s3 + $0x14] sm:$0xf]
        %v1778 = vld [vmem:[%s3 + $0x18] sm:$0xf]
        %v1779 = vld [vmem:[%s3 + $0x1c] sm:$0xf]
        %v1780 = vld [vmem:[%s3 + $0x20] sm:$0xf]
        %v1781 = vld [vmem:[%s3 + $0x24] sm:$0xf]
        %v1782 = vld [vmem:[%s3 + $0x28] sm:$0xf]
        %v1783 = vld [vmem:[%s3 + $0x2c] sm:$0xf]
        %v1784 = vld [vmem:[%s3 + $0x30] sm:$0xf]
        %v1785 = vld [vmem:[%s3 + $0x34] sm:$0xf]
        %v1786 = vld [vmem:[%s3 + $0x38] sm:$0xf]
        %v1787 = vld [vmem:[%s3 + $0x3c] sm:$0xf]
        %v1788 = vld [vmem:[%s3 + $0x40] sm:$0xf]
        %v1789 = vld [vmem:[%s3 + $0x44] sm:$0xf]
        %v1790 = vld [vmem:[%s4] sm:$0x1]
        %v1792 = vlaneseq
        %v1793 = vshrl.u32 %v1792, 7
        %v1794 = vsub.s32 0, %v1793
        %v1795 = vrot.slane %v1790, %v1794
        %v1815 = vunpack.c.l.b16 %v1772
        %v1816 = vunpack.c.l.b16 %v1773
        %v1817 = vunpack.c.l.b16 %v1774
        %v1818 = vunpack.c.l.b16 %v1775
        %v1819 = vunpack.c.l.b16 %v1776
        %v1820 = vunpack.c.l.b16 %v1777
        %v1821 = vunpack.c.l.b16 %v1778
        %v1822 = vunpack.c.l.b16 %v1779
        %v1823 = vunpack.c.l.b16 %v1780
        %v1824 = vunpack.c.l.b16 %v1781
        %v1825 = vunpack.c.l.b16 %v1782
        %v1826 = vunpack.c.l.b16 %v1783
        %v1827 = vunpack.c.l.b16 %v1784
        %v1828 = vunpack.c.l.b16 %v1785
        %v1829 = vunpack.c.l.b16 %v1786
        %v1830 = vunpack.c.l.b16 %v1787
        %v1831 = vunpack.c.l.b16 %v1788
        %v1832 = vunpack.c.l.b16 %v1789
        %v1833 = vpack.c.b16 %v1816, %v1815
        %v1834 = vpack.c.b16 %v1818, %v1817
        %v1835 = vpack.c.b16 %v1820, %v1819
        %v1836 = vpack.c.b16 %v1822, %v1821
        %v1837 = vpack.c.b16 %v1824, %v1823
        %v1838 = vpack.c.b16 %v1826, %v1825
        %v1839 = vpack.c.b16 %v1828, %v1827
        %v1840 = vpack.c.b16 %v1830, %v1829
        %v1841 = vpack.c.b16 %v1832, %v1831
        %v1852 = vsel %vm1645, %v1623, 0
        %v1855 = vsel %vm1645, %v1626, 0
        %v1858 = vsel %vm1645, %v1629, 0
        %v1861 = vsel %vm1645, %v1632, 0
        %v1864 = vsel %vm1645, %v1635, 0
        %v1867 = vsel %vm1645, %v1638, 0
        %v1870 = vsel %vm1645, %v1641, 0
        %v1873 = vsel %vm1645, %v1644, 0
        %1875 = vmatprep.subr.bf16.mxu0 0
        %1876 = vmatpush1.bf16.msra.mxu0 %v1833
        %1877 = vmatprep.subr.bf16.mxu0 0
        %1878 = vmatpush1.bf16.msra.mxu0 %v1834
        %1879 = vmatprep.subr.bf16.mxu0 0
        %1880 = vmatpush1.bf16.msra.mxu0 %v1835
        %1881 = vmatprep.subr.bf16.mxu0 0
        %1882 = vmatpush1.bf16.msra.mxu0 %v1836
        %1883 = vmatprep.subr.bf16.mxu0 0
        %1884 = vmatpush1.bf16.msra.mxu0 %v1837
        %1885 = vmatprep.subr.bf16.mxu0 0
        %1886 = vmatpush1.bf16.msra.mxu0 %v1838
        %1887 = vmatprep.subr.bf16.mxu0 0
        %1888 = vmatpush1.bf16.msra.mxu0 %v1839
        %1889 = vmatprep.subr.bf16.mxu0 0
        %1890 = vmatpush1.bf16.msra.mxu0 %v1840
        %1891 = vmatprep.subr.bf16.mxu0 0
        %1892 = vmatpush1.bf16.msra.mxu0 %v1841
        %1893 = vmatprep.subr.bf16.mxu0 0
        %1894 = vmatpush1.bf16.msra.mxu0 0
        %1895 = vmatprep.subr.bf16.mxu0 0
        %1896 = vmatpush1.bf16.msra.mxu0 0
        %1897 = vmatprep.subr.bf16.mxu0 0
        %1898 = vmatpush1.bf16.msra.mxu0 0
        %1899 = vmatprep.subr.bf16.mxu0 0
        %1900 = vmatpush1.bf16.msra.mxu0 0
        %1901 = vmatprep.subr.bf16.mxu0 0
        %1902 = vmatpush1.bf16.msra.mxu0 0
        %1903 = vmatprep.subr.bf16.mxu0 0
        %1904 = vmatpush1.bf16.msra.mxu0 0
        %1905 = vmatprep.subr.bf16.mxu0 0
        %1906 = vmatpush1.bf16.msra.mxu0 0
        %1907 = vmatprep.mubr.bf16.mxu0 %v1852
        %1908 = vmatmul.mubr.bf16.gmra.mrb[0].mxu0 %v1749
        %v1909 = vpop.f32.mrb[0].mxu0
        %v1910 = vadd.f32 %v1795, %v1909
        %v1911 = vpop.f32.mrb[0].mxu0
        %v1912 = vpop.f32.mrb[0].mxu0
        %v1913 = vadd.f32 %v1795, %v1912
        %v1914 = vpop.f32.mrb[0].mxu0
        %1915 = vmatprep.mubr.bf16.mxu0 %v1855
        %1916 = vmatmul.mubr.bf16.gmra.mrb[0].mxu0 %v1752
        %v1917 = vpop.f32.mrb[0].mxu0
        %v1918 = vadd.f32 %v1795, %v1917
        %v1919 = vpop.f32.mrb[0].mxu0
        %v1920 = vpop.f32.mrb[0].mxu0
        %v1921 = vadd.f32 %v1795, %v1920
        %v1922 = vpop.f32.mrb[0].mxu0
        %1923 = vmatprep.mubr.bf16.mxu0 %v1858
        %1924 = vmatmul.mubr.bf16.gmra.mrb[0].mxu0 %v1755
        %v1925 = vpop.f32.mrb[0].mxu0
        %v1926 = vadd.f32 %v1795, %v1925
        %v1927 = vpop.f32.mrb[0].mxu0
        %v1928 = vpop.f32.mrb[0].mxu0
        %v1929 = vadd.f32 %v1795, %v1928
        %v1930 = vpop.f32.mrb[0].mxu0
        %1931 = vmatprep.mubr.bf16.mxu0 %v1861
        %1932 = vmatmul.mubr.bf16.gmra.mrb[0].mxu0 %v1758
        %v1933 = vpop.f32.mrb[0].mxu0
        %v1934 = vadd.f32 %v1795, %v1933
        %v1935 = vpop.f32.mrb[0].mxu0
        %v1936 = vpop.f32.mrb[0].mxu0
        %v1937 = vadd.f32 %v1795, %v1936
        %v1938 = vpop.f32.mrb[0].mxu0
        %1939 = vmatprep.mubr.bf16.mxu0 %v1864
        %1940 = vmatmul.mubr.bf16.gmra.mrb[0].mxu0 %v1761
        %v1941 = vpop.f32.mrb[0].mxu0
        %v1942 = vadd.f32 %v1795, %v1941
        %v1943 = vpop.f32.mrb[0].mxu0
        %v1944 = vpop.f32.mrb[0].mxu0
        %v1945 = vadd.f32 %v1795, %v1944
        %v1946 = vpop.f32.mrb[0].mxu0
        %1947 = vmatprep.mubr.bf16.mxu0 %v1867
        %1948 = vmatmul.mubr.bf16.gmra.mrb[0].mxu0 %v1764
        %v1949 = vpop.f32.mrb[0].mxu0
        %v1950 = vadd.f32 %v1795, %v1949
        %v1951 = vpop.f32.mrb[0].mxu0
        %v1952 = vpop.f32.mrb[0].mxu0
        %v1953 = vadd.f32 %v1795, %v1952
        %v1954 = vpop.f32.mrb[0].mxu0
        %1955 = vmatprep.mubr.bf16.mxu0 %v1870
        %1956 = vmatmul.mubr.bf16.gmra.mrb[0].mxu0 %v1767
        %v1957 = vpop.f32.mrb[0].mxu0
        %v1958 = vadd.f32 %v1795, %v1957
        %v1959 = vpop.f32.mrb[0].mxu0
        %v1960 = vpop.f32.mrb[0].mxu0
        %v1961 = vadd.f32 %v1795, %v1960
        %v1962 = vpop.f32.mrb[0].mxu0
        %1963 = vmatprep.mubr.bf16.mxu0 %v1873
        %1964 = vmatmul.mubr.bf16.gmra.mrb[0].mxu0 %v1770
        %v1965 = vpop.f32.mrb[0].mxu0
        %v1966 = vadd.f32 %v1795, %v1965
        %v1967 = vpop.f32.mrb[0].mxu0
        %v1968 = vpop.f32.mrb[0].mxu0
        %v1969 = vadd.f32 %v1795, %v1968
        %v1970 = vpop.f32.mrb[0].mxu0
        %1971 = vdwg.mxu0
        %v1972 = vxor.u32 %v1910, 2147483648
        %v1973 = vxor.u32 %v1913, 2147483648
        %v1974 = vxor.u32 %v1918, 2147483648
        %v1975 = vxor.u32 %v1921, 2147483648
        %v1976 = vxor.u32 %v1926, 2147483648
        %v1977 = vxor.u32 %v1929, 2147483648
        %v1978 = vxor.u32 %v1934, 2147483648
        %v1979 = vxor.u32 %v1937, 2147483648
        %v1980 = vxor.u32 %v1942, 2147483648
        %v1981 = vxor.u32 %v1945, 2147483648
        %v1982 = vxor.u32 %v1950, 2147483648
        %v1983 = vxor.u32 %v1953, 2147483648
        %v1984 = vxor.u32 %v1958, 2147483648
        %v1985 = vxor.u32 %v1961, 2147483648
        %v1986 = vxor.u32 %v1966, 2147483648
        %v1987 = vxor.u32 %v1969, 2147483648
        %v1988 = vmul.f32 %v1972, 1.442695
        %v1989 = vpow.pop %v1988
        %v1990 = vmul.f32 %v1973, 1.442695
        %v1991 = vpow.pop %v1990
        %v1992 = vmul.f32 %v1974, 1.442695
        %v1993 = vpow.pop %v1992
        %v1994 = vmul.f32 %v1975, 1.442695
        %v1995 = vpow.pop %v1994
        %v1996 = vmul.f32 %v1976, 1.442695
        %v1997 = vpow.pop %v1996
        %v1998 = vmul.f32 %v1977, 1.442695
        %v1999 = vpow.pop %v1998
        %v2000 = vmul.f32 %v1978, 1.442695
        %v2001 = vpow.pop %v2000
        %v2002 = vmul.f32 %v1979, 1.442695
        %v2003 = vpow.pop %v2002
        %v2004 = vmul.f32 %v1980, 1.442695
        %v2005 = vpow.pop %v2004
        %v2006 = vmul.f32 %v1981, 1.442695
        %v2007 = vpow.pop %v2006
        %v2008 = vmul.f32 %v1982, 1.442695
        %v2009 = vpow.pop %v2008
        %v2010 = vmul.f32 %v1983, 1.442695
        %v2011 = vpow.pop %v2010
        %v2012 = vmul.f32 %v1984, 1.442695
        %v2013 = vpow.pop %v2012
        %v2014 = vmul.f32 %v1985, 1.442695
        %v2015 = vpow.pop %v2014
        %v2016 = vmul.f32 %v1986, 1.442695
        %v2017 = vpow.pop %v2016
        %v2018 = vmul.f32 %v1987, 1.442695
        %v2019 = vpow.pop %v2018
        %v2020 = vadd.f32 %v1989, 1.0
        %v2021 = vadd.f32 %v1991, 1.0
        %v2022 = vadd.f32 %v1993, 1.0
        %v2023 = vadd.f32 %v1995, 1.0
        %v2024 = vadd.f32 %v1997, 1.0
        %v2025 = vadd.f32 %v1999, 1.0
        %v2026 = vadd.f32 %v2001, 1.0
        %v2027 = vadd.f32 %v2003, 1.0
        %v2028 = vadd.f32 %v2005, 1.0
        %v2029 = vadd.f32 %v2007, 1.0
        %v2030 = vadd.f32 %v2009, 1.0
        %v2031 = vadd.f32 %v2011, 1.0
        %v2032 = vadd.f32 %v2013, 1.0
        %v2033 = vadd.f32 %v2015, 1.0
        %v2034 = vadd.f32 %v2017, 1.0
        %v2035 = vadd.f32 %v2019, 1.0
        %v2036 = vrcp.pop %v2020
        %v2037 = vmul.f32 1.0, %v2036
        %v2038 = vrcp.pop %v2021
        %v2039 = vmul.f32 1.0, %v2038
        %v2040 = vrcp.pop %v2022
        %v2041 = vmul.f32 1.0, %v2040
        %v2042 = vrcp.pop %v2023
        %v2043 = vmul.f32 1.0, %v2042
        %v2044 = vrcp.pop %v2024
        %v2045 = vmul.f32 1.0, %v2044
        %v2046 = vrcp.pop %v2025
        %v2047 = vmul.f32 1.0, %v2046
        %v2048 = vrcp.pop %v2026
        %v2049 = vmul.f32 1.0, %v2048
        %v2050 = vrcp.pop %v2027
        %v2051 = vmul.f32 1.0, %v2050
        %v2052 = vrcp.pop %v2028
        %v2053 = vmul.f32 1.0, %v2052
        %v2054 = vrcp.pop %v2029
        %v2055 = vmul.f32 1.0, %v2054
        %v2056 = vrcp.pop %v2030
        %v2057 = vmul.f32 1.0, %v2056
        %v2058 = vrcp.pop %v2031
        %v2059 = vmul.f32 1.0, %v2058
        %v2060 = vrcp.pop %v2032
        %v2061 = vmul.f32 1.0, %v2060
        %v2062 = vrcp.pop %v2033
        %v2063 = vmul.f32 1.0, %v2062
        %v2064 = vrcp.pop %v2034
        %v2065 = vmul.f32 1.0, %v2064
        %v2066 = vrcp.pop %v2035
        %v2067 = vmul.f32 1.0, %v2066
        %v2068 = vmul.f32 %v1910, %v2037
        %v2069 = vmul.f32 %v1913, %v2039
        %v2070 = vmul.f32 %v1918, %v2041
        %v2071 = vmul.f32 %v1921, %v2043
        %v2072 = vmul.f32 %v1926, %v2045
        %v2073 = vmul.f32 %v1929, %v2047
        %v2074 = vmul.f32 %v1934, %v2049
        %v2075 = vmul.f32 %v1937, %v2051
        %v2076 = vmul.f32 %v1942, %v2053
        %v2077 = vmul.f32 %v1945, %v2055
        %v2078 = vmul.f32 %v1950, %v2057
        %v2079 = vmul.f32 %v1953, %v2059
        %v2080 = vmul.f32 %v1958, %v2061
        %v2081 = vmul.f32 %v1961, %v2063
        %v2082 = vmul.f32 %v1966, %v2065
        %v2083 = vmul.f32 %v1969, %v2067
        %v2084 = vpack.c.bf16 %v2069, %v2068
        %v2085 = vpack.c.bf16 %v2071, %v2070
        %v2086 = vpack.c.bf16 %v2073, %v2072
        %v2087 = vpack.c.bf16 %v2075, %v2074
        %v2088 = vpack.c.bf16 %v2077, %v2076
        %v2089 = vpack.c.bf16 %v2079, %v2078
        %v2090 = vpack.c.bf16 %v2081, %v2080
        %v2091 = vpack.c.bf16 %v2083, %v2082
        %v2092 = vld [vmem:[%s5] sm:$0xf]
        %v2093 = vld [vmem:[%s6] sm:$0x1]
        %v2095 = vlaneseq
        %v2096 = vshrl.u32 %v2095, 7
        %v2097 = vsub.s32 0, %v2096
        %v2098 = vrot.slane %v2093, %v2097
        %vm2100 = vcmask 64512
        %v2102 = vsel %vm2100, %v2084, 0
        %v2105 = vsel %vm2100, %v2085, 0
        %v2108 = vsel %vm2100, %v2086, 0
        %v2111 = vsel %vm2100, %v2087, 0
        %v2114 = vsel %vm2100, %v2088, 0
        %v2117 = vsel %vm2100, %v2089, 0
        %v2120 = vsel %vm2100, %v2090, 0
        %v2123 = vsel %vm2100, %v2091, 0
        %vm2125 = vcmask 1043456
        %v2127 = vsel %vm2125, %v2092, 0
        %2129 = vmatprep.subr.bf16.mxu0 0
        %2130 = vmatpush1.bf16.msra.mxu0 %v2127
        %2131 = vmatprep.subr.bf16.mxu0 0
        %2132 = vmatpush1.bf16.msra.mxu0 0
        %2133 = vmatprep.subr.bf16.mxu0 0
        %2134 = vmatpush1.bf16.msra.mxu0 0
        %2135 = vmatprep.subr.bf16.mxu0 0
        %2136 = vmatpush1.bf16.msra.mxu0 0
        %2137 = vmatprep.subr.bf16.mxu0 0
        %2138 = vmatpush1.bf16.msra.mxu0 0
        %2139 = vmatprep.subr.bf16.mxu0 0
        %2140 = vmatpush1.bf16.msra.mxu0 0
        %2141 = vmatprep.subr.bf16.mxu0 0
        %2142 = vmatpush1.bf16.msra.mxu0 0
        %2143 = vmatprep.subr.bf16.mxu0 0
        %2144 = vmatpush1.bf16.msra.mxu0 0
        %2145 = vmatprep.subr.bf16.mxu0 0
        %2146 = vmatpush1.bf16.msra.mxu0 0
        %2147 = vmatprep.subr.bf16.mxu0 0
        %2148 = vmatpush1.bf16.msra.mxu0 0
        %2149 = vmatprep.subr.bf16.mxu0 0
        %2150 = vmatpush1.bf16.msra.mxu0 0
        %2151 = vmatprep.subr.bf16.mxu0 0
        %2152 = vmatpush1.bf16.msra.mxu0 0
        %2153 = vmatprep.subr.bf16.mxu0 0
        %2154 = vmatpush1.bf16.msra.mxu0 0
        %2155 = vmatprep.subr.bf16.mxu0 0
        %2156 = vmatpush1.bf16.msra.mxu0 0
        %2157 = vmatprep.subr.bf16.mxu0 0
        %2158 = vmatpush1.bf16.msra.mxu0 0
        %2159 = vmatprep.subr.bf16.mxu0 0
        %2160 = vmatpush1.bf16.msra.mxu0 0
        %2161 = vmatprep.mubr.bf16.mxu0 0
        %2162 = vmatmul.mubr.bf16.gmra.mrb[0].mxu0 %v2102
        %v2163 = vpop.f32.mrb[0].mxu0
        %v2164 = vadd.f32 %v2098, %v2163
        %v2165 = vpop.f32.mrb[0].mxu0
        %v2166 = vpop.f32.mrb[0].mxu0
        %v2167 = vadd.f32 %v2098, %v2166
        %v2168 = vpop.f32.mrb[0].mxu0
        %2169 = vmatprep.mubr.bf16.mxu0 0
        %2170 = vmatmul.mubr.bf16.gmra.mrb[0].mxu0 %v2105
        %v2171 = vpop.f32.mrb[0].mxu0
        %v2172 = vadd.f32 %v2098, %v2171
        %v2173 = vpop.f32.mrb[0].mxu0
        %v2174 = vpop.f32.mrb[0].mxu0
        %v2175 = vadd.f32 %v2098, %v2174
        %v2176 = vpop.f32.mrb[0].mxu0
        %2177 = vmatprep.mubr.bf16.mxu0 0
        %2178 = vmatmul.mubr.bf16.gmra.mrb[0].mxu0 %v2108
        %v2179 = vpop.f32.mrb[0].mxu0
        %v2180 = vadd.f32 %v2098, %v2179
        %v2181 = vpop.f32.mrb[0].mxu0
        %v2182 = vpop.f32.mrb[0].mxu0
        %v2183 = vadd.f32 %v2098, %v2182
        %v2184 = vpop.f32.mrb[0].mxu0
        %2185 = vmatprep.mubr.bf16.mxu0 0
        %2186 = vmatmul.mubr.bf16.gmra.mrb[0].mxu0 %v2111
        %v2187 = vpop.f32.mrb[0].mxu0
        %v2188 = vadd.f32 %v2098, %v2187
        %v2189 = vpop.f32.mrb[0].mxu0
        %v2190 = vpop.f32.mrb[0].mxu0
        %v2191 = vadd.f32 %v2098, %v2190
        %v2192 = vpop.f32.mrb[0].mxu0
        %2193 = vmatprep.mubr.bf16.mxu0 0
        %2194 = vmatmul.mubr.bf16.gmra.mrb[0].mxu0 %v2114
        %v2195 = vpop.f32.mrb[0].mxu0
        %v2196 = vadd.f32 %v2098, %v2195
        %v2197 = vpop.f32.mrb[0].mxu0
        %v2198 = vpop.f32.mrb[0].mxu0
        %v2199 = vadd.f32 %v2098, %v2198
        %v2200 = vpop.f32.mrb[0].mxu0
        %2201 = vmatprep.mubr.bf16.mxu0 0
        %2202 = vmatmul.mubr.bf16.gmra.mrb[0].mxu0 %v2117
        %v2203 = vpop.f32.mrb[0].mxu0
        %v2204 = vadd.f32 %v2098, %v2203
        %v2205 = vpop.f32.mrb[0].mxu0
        %v2206 = vpop.f32.mrb[0].mxu0
        %v2207 = vadd.f32 %v2098, %v2206
        %v2208 = vpop.f32.mrb[0].mxu0
        %2209 = vmatprep.mubr.bf16.mxu0 0
        %2210 = vmatmul.mubr.bf16.gmra.mrb[0].mxu0 %v2120
        %v2211 = vpop.f32.mrb[0].mxu0
        %v2212 = vadd.f32 %v2098, %v2211
        %v2213 = vpop.f32.mrb[0].mxu0
        %v2214 = vpop.f32.mrb[0].mxu0
        %v2215 = vadd.f32 %v2098, %v2214
        %v2216 = vpop.f32.mrb[0].mxu0
        %2217 = vmatprep.mubr.bf16.mxu0 0
        %2218 = vmatmul.mubr.bf16.gmra.mrb[0].mxu0 %v2123
        %v2219 = vpop.f32.mrb[0].mxu0
        %v2220 = vadd.f32 %v2098, %v2219
        %v2221 = vpop.f32.mrb[0].mxu0
        %v2222 = vpop.f32.mrb[0].mxu0
        %v2223 = vadd.f32 %v2098, %v2222
        %v2224 = vpop.f32.mrb[0].mxu0
        %2225 = vdwg.mxu0
        %v2226 = vxor.u32 %v2164, 2147483648
        %v2227 = vxor.u32 %v2167, 2147483648
        %v2228 = vxor.u32 %v2172, 2147483648
        %v2229 = vxor.u32 %v2175, 2147483648
        %v2230 = vxor.u32 %v2180, 2147483648
        %v2231 = vxor.u32 %v2183, 2147483648
        %v2232 = vxor.u32 %v2188, 2147483648
        %v2233 = vxor.u32 %v2191, 2147483648
        %v2234 = vxor.u32 %v2196, 2147483648
        %v2235 = vxor.u32 %v2199, 2147483648
        %v2236 = vxor.u32 %v2204, 2147483648
        %v2237 = vxor.u32 %v2207, 2147483648
        %v2238 = vxor.u32 %v2212, 2147483648
        %v2239 = vxor.u32 %v2215, 2147483648
        %v2240 = vxor.u32 %v2220, 2147483648
        %v2241 = vxor.u32 %v2223, 2147483648
        %v2242 = vmul.f32 %v2226, 1.442695
        %v2243 = vpow.pop %v2242
        %v2244 = vmul.f32 %v2227, 1.442695
        %v2245 = vpow.pop %v2244
        %v2246 = vmul.f32 %v2228, 1.442695
        %v2247 = vpow.pop %v2246
        %v2248 = vmul.f32 %v2229, 1.442695
        %v2249 = vpow.pop %v2248
        %v2250 = vmul.f32 %v2230, 1.442695
        %v2251 = vpow.pop %v2250
        %v2252 = vmul.f32 %v2231, 1.442695
        %v2253 = vpow.pop %v2252
        %v2254 = vmul.f32 %v2232, 1.442695
        %v2255 = vpow.pop %v2254
        %v2256 = vmul.f32 %v2233, 1.442695
        %v2257 = vpow.pop %v2256
        %v2258 = vmul.f32 %v2234, 1.442695
        %v2259 = vpow.pop %v2258
        %v2260 = vmul.f32 %v2235, 1.442695
        %v2261 = vpow.pop %v2260
        %v2262 = vmul.f32 %v2236, 1.442695
        %v2263 = vpow.pop %v2262
        %v2264 = vmul.f32 %v2237, 1.442695
        %v2265 = vpow.pop %v2264
        %v2266 = vmul.f32 %v2238, 1.442695
        %v2267 = vpow.pop %v2266
        %v2268 = vmul.f32 %v2239, 1.442695
        %v2269 = vpow.pop %v2268
        %v2270 = vmul.f32 %v2240, 1.442695
        %v2271 = vpow.pop %v2270
        %v2272 = vmul.f32 %v2241, 1.442695
        %v2273 = vpow.pop %v2272
        %v2274 = vadd.f32 %v2243, 1.0
        %v2275 = vadd.f32 %v2245, 1.0
        %v2276 = vadd.f32 %v2247, 1.0
        %v2277 = vadd.f32 %v2249, 1.0
        %v2278 = vadd.f32 %v2251, 1.0
        %v2279 = vadd.f32 %v2253, 1.0
        %v2280 = vadd.f32 %v2255, 1.0
        %v2281 = vadd.f32 %v2257, 1.0
        %v2282 = vadd.f32 %v2259, 1.0
        %v2283 = vadd.f32 %v2261, 1.0
        %v2284 = vadd.f32 %v2263, 1.0
        %v2285 = vadd.f32 %v2265, 1.0
        %v2286 = vadd.f32 %v2267, 1.0
        %v2287 = vadd.f32 %v2269, 1.0
        %v2288 = vadd.f32 %v2271, 1.0
        %v2289 = vadd.f32 %v2273, 1.0
        %v2290 = vrcp.pop %v2274
        %v2291 = vmul.f32 1.0, %v2290
        %v2292 = vrcp.pop %v2275
        %v2293 = vmul.f32 1.0, %v2292
        %v2294 = vrcp.pop %v2276
        %v2295 = vmul.f32 1.0, %v2294
        %v2296 = vrcp.pop %v2277
        %v2297 = vmul.f32 1.0, %v2296
        %v2298 = vrcp.pop %v2278
        %v2299 = vmul.f32 1.0, %v2298
        %v2300 = vrcp.pop %v2279
        %v2301 = vmul.f32 1.0, %v2300
        %v2302 = vrcp.pop %v2280
        %v2303 = vmul.f32 1.0, %v2302
        %v2304 = vrcp.pop %v2281
        %v2305 = vmul.f32 1.0, %v2304
        %v2306 = vrcp.pop %v2282
        %v2307 = vmul.f32 1.0, %v2306
        %v2308 = vrcp.pop %v2283
        %v2309 = vmul.f32 1.0, %v2308
        %v2310 = vrcp.pop %v2284
        %v2311 = vmul.f32 1.0, %v2310
        %v2312 = vrcp.pop %v2285
        %v2313 = vmul.f32 1.0, %v2312
        %v2314 = vrcp.pop %v2286
        %v2315 = vmul.f32 1.0, %v2314
        %v2316 = vrcp.pop %v2287
        %v2317 = vmul.f32 1.0, %v2316
        %v2318 = vrcp.pop %v2288
        %v2319 = vmul.f32 1.0, %v2318
        %v2320 = vrcp.pop %v2289
        %v2321 = vmul.f32 1.0, %v2320
        %v2322 = vmul.f32 %v2164, %v2291
        %v2323 = vmul.f32 %v2167, %v2293
        %v2324 = vmul.f32 %v2172, %v2295
        %v2325 = vmul.f32 %v2175, %v2297
        %v2326 = vmul.f32 %v2180, %v2299
        %v2327 = vmul.f32 %v2183, %v2301
        %v2328 = vmul.f32 %v2188, %v2303
        %v2329 = vmul.f32 %v2191, %v2305
        %v2330 = vmul.f32 %v2196, %v2307
        %v2331 = vmul.f32 %v2199, %v2309
        %v2332 = vmul.f32 %v2204, %v2311
        %v2333 = vmul.f32 %v2207, %v2313
        %v2334 = vmul.f32 %v2212, %v2315
        %v2335 = vmul.f32 %v2215, %v2317
        %v2336 = vmul.f32 %v2220, %v2319
        %v2337 = vmul.f32 %v2223, %v2321
        %vm2338 = vsmask.f32 3328
        %vm2339 = vsmask.f32 7440
        %vm2340 = vmor %vm2338, %vm2339
        %v2342 = vshrl.u32 %v842, 16
        %v2344 = vrot.slane %v2342, 4
        %v2345 = vshll.u32 %v842, 16
        %v2347 = vrot.slane %v2345, 5
        %v2348 = vor.u32 %v2344, %v2347
        %v2349 = vrot.slane %v2348, 4
        %v2351 = vshll.u32 %v843, 16
        %v2353 = vrot.slane %v2351, 5
        %v2354 = vsel %vm2340, %v2349, %v2353
        %v2355 = vshrl.u32 %v843, 16
        %v2357 = vrot.slane %v2355, 4
        %v2358 = vor.u32 %v2357, %v2353
        %v2359 = vrot.slane %v2358, 4
        %v2361 = vshll.u32 %v858, 16
        %v2363 = vrot.slane %v2361, 5
        %v2364 = vsel %vm2340, %v2359, %v2363
        %v2366 = vshrl.u32 %v844, 16
        %v2368 = vrot.slane %v2366, 4
        %v2369 = vshll.u32 %v844, 16
        %v2371 = vrot.slane %v2369, 5
        %v2372 = vor.u32 %v2368, %v2371
        %v2373 = vrot.slane %v2372, 4
        %v2375 = vshll.u32 %v845, 16
        %v2377 = vrot.slane %v2375, 5
        %v2378 = vsel %vm2340, %v2373, %v2377
        %v2379 = vshrl.u32 %v845, 16
        %v2381 = vrot.slane %v2379, 4
        %v2382 = vor.u32 %v2381, %v2377
        %v2383 = vrot.slane %v2382, 4
        %v2385 = vshll.u32 %v859, 16
        %v2387 = vrot.slane %v2385, 5
        %v2388 = vsel %vm2340, %v2383, %v2387
        %v2390 = vshrl.u32 %v846, 16
        %v2392 = vrot.slane %v2390, 4
        %v2393 = vshll.u32 %v846, 16
        %v2395 = vrot.slane %v2393, 5
        %v2396 = vor.u32 %v2392, %v2395
        %v2397 = vrot.slane %v2396, 4
        %v2399 = vshll.u32 %v847, 16
        %v2401 = vrot.slane %v2399, 5
        %v2402 = vsel %vm2340, %v2397, %v2401
        %v2403 = vshrl.u32 %v847, 16
        %v2405 = vrot.slane %v2403, 4
        %v2406 = vor.u32 %v2405, %v2401
        %v2407 = vrot.slane %v2406, 4
        %v2409 = vshll.u32 %v860, 16
        %v2411 = vrot.slane %v2409, 5
        %v2412 = vsel %vm2340, %v2407, %v2411
        %v2414 = vshrl.u32 %v848, 16
        %v2416 = vrot.slane %v2414, 4
        %v2417 = vshll.u32 %v848, 16
        %v2419 = vrot.slane %v2417, 5
        %v2420 = vor.u32 %v2416, %v2419
        %v2421 = vrot.slane %v2420, 4
        %v2423 = vshll.u32 %v849, 16
        %v2425 = vrot.slane %v2423, 5
        %v2426 = vsel %vm2340, %v2421, %v2425
        %v2427 = vshrl.u32 %v849, 16
        %v2429 = vrot.slane %v2427, 4
        %v2430 = vor.u32 %v2429, %v2425
        %v2431 = vrot.slane %v2430, 4
        %v2433 = vshll.u32 %v861, 16
        %v2435 = vrot.slane %v2433, 5
        %v2436 = vsel %vm2340, %v2431, %v2435
        %v2438 = vshrl.u32 %v850, 16
        %v2440 = vrot.slane %v2438, 4
        %v2441 = vshll.u32 %v850, 16
        %v2443 = vrot.slane %v2441, 5
        %v2444 = vor.u32 %v2440, %v2443
        %v2445 = vrot.slane %v2444, 4
        %v2447 = vshll.u32 %v851, 16
        %v2449 = vrot.slane %v2447, 5
        %v2450 = vsel %vm2340, %v2445, %v2449
        %v2451 = vshrl.u32 %v851, 16
        %v2453 = vrot.slane %v2451, 4
        %v2454 = vor.u32 %v2453, %v2449
        %v2455 = vrot.slane %v2454, 4
        %v2457 = vshll.u32 %v862, 16
        %v2459 = vrot.slane %v2457, 5
        %v2460 = vsel %vm2340, %v2455, %v2459
        %v2462 = vshrl.u32 %v852, 16
        %v2464 = vrot.slane %v2462, 4
        %v2465 = vshll.u32 %v852, 16
        %v2467 = vrot.slane %v2465, 5
        %v2468 = vor.u32 %v2464, %v2467
        %v2469 = vrot.slane %v2468, 4
        %v2471 = vshll.u32 %v853, 16
        %v2473 = vrot.slane %v2471, 5
        %v2474 = vsel %vm2340, %v2469, %v2473
        %v2475 = vshrl.u32 %v853, 16
        %v2477 = vrot.slane %v2475, 4
        %v2478 = vor.u32 %v2477, %v2473
        %v2479 = vrot.slane %v2478, 4
        %v2481 = vshll.u32 %v863, 16
        %v2483 = vrot.slane %v2481, 5
        %v2484 = vsel %vm2340, %v2479, %v2483
        %v2486 = vshrl.u32 %v854, 16
        %v2488 = vrot.slane %v2486, 4
        %v2489 = vshll.u32 %v854, 16
        %v2491 = vrot.slane %v2489, 5
        %v2492 = vor.u32 %v2488, %v2491
        %v2493 = vrot.slane %v2492, 4
        %v2495 = vshll.u32 %v855, 16
        %v2497 = vrot.slane %v2495, 5
        %v2498 = vsel %vm2340, %v2493, %v2497
        %v2499 = vshrl.u32 %v855, 16
        %v2501 = vrot.slane %v2499, 4
        %v2502 = vor.u32 %v2501, %v2497
        %v2503 = vrot.slane %v2502, 4
        %v2505 = vshll.u32 %v864, 16
        %v2507 = vrot.slane %v2505, 5
        %v2508 = vsel %vm2340, %v2503, %v2507
        %v2510 = vshrl.u32 %v856, 16
        %v2512 = vrot.slane %v2510, 4
        %v2513 = vshll.u32 %v856, 16
        %v2515 = vrot.slane %v2513, 5
        %v2516 = vor.u32 %v2512, %v2515
        %v2517 = vrot.slane %v2516, 4
        %v2519 = vshll.u32 %v857, 16
        %v2521 = vrot.slane %v2519, 5
        %v2522 = vsel %vm2340, %v2517, %v2521
        %v2523 = vshrl.u32 %v857, 16
        %v2525 = vrot.slane %v2523, 4
        %v2526 = vor.u32 %v2525, %v2521
        %v2527 = vrot.slane %v2526, 4
        %v2529 = vshll.u32 %v865, 16
        %v2531 = vrot.slane %v2529, 5
        %v2532 = vsel %vm2340, %v2527, %v2531
        %v2549 = vunpack.c.l.bf16 %v2354
        %v2550 = vunpack.c.l.bf16 %v2364
        %v2551 = vunpack.c.l.bf16 %v2378
        %v2552 = vunpack.c.l.bf16 %v2388
        %v2553 = vunpack.c.l.bf16 %v2402
        %v2554 = vunpack.c.l.bf16 %v2412
        %v2555 = vunpack.c.l.bf16 %v2426
        %v2556 = vunpack.c.l.bf16 %v2436
        %v2557 = vunpack.c.l.bf16 %v2450
        %v2558 = vunpack.c.l.bf16 %v2460
        %v2559 = vunpack.c.l.bf16 %v2474
        %v2560 = vunpack.c.l.bf16 %v2484
        %v2561 = vunpack.c.l.bf16 %v2498
        %v2562 = vunpack.c.l.bf16 %v2508
        %v2563 = vunpack.c.l.bf16 %v2522
        %v2564 = vunpack.c.l.bf16 %v2532
        %v2565 = vadd.f32 %v2549, %v2322
        %v2566 = vadd.f32 %v2550, %v2323
        %v2567 = vadd.f32 %v2551, %v2324
        %v2568 = vadd.f32 %v2552, %v2325
        %v2569 = vadd.f32 %v2553, %v2326
        %v2570 = vadd.f32 %v2554, %v2327
        %v2571 = vadd.f32 %v2555, %v2328
        %v2572 = vadd.f32 %v2556, %v2329
        %v2573 = vadd.f32 %v2557, %v2330
        %v2574 = vadd.f32 %v2558, %v2331
        %v2575 = vadd.f32 %v2559, %v2332
        %v2576 = vadd.f32 %v2560, %v2333
        %v2577 = vadd.f32 %v2561, %v2334
        %v2578 = vadd.f32 %v2562, %v2335
        %v2579 = vadd.f32 %v2563, %v2336
        %v2580 = vadd.f32 %v2564, %v2337
        %v2581 = vpack.c.bf16 %v2566, %v2565
        %v2582 = vpack.c.bf16 %v2568, %v2567
        %v2583 = vpack.c.bf16 %v2570, %v2569
        %v2584 = vpack.c.bf16 %v2572, %v2571
        %v2585 = vpack.c.bf16 %v2574, %v2573
        %v2586 = vpack.c.bf16 %v2576, %v2575
        %v2587 = vpack.c.bf16 %v2578, %v2577
        %v2588 = vpack.c.bf16 %v2580, %v2579
        %v2597 = vunpack.c.l.b16 %v2581
        %v2598 = vunpack.c.h.b16 %v2581
        %v2599 = vunpack.c.l.b16 %v2582
        %v2600 = vunpack.c.h.b16 %v2582
        %v2601 = vunpack.c.l.b16 %v2583
        %v2602 = vunpack.c.h.b16 %v2583
        %v2603 = vunpack.c.l.b16 %v2584
        %v2604 = vunpack.c.h.b16 %v2584
        %v2605 = vunpack.c.l.b16 %v2585
        %v2606 = vunpack.c.h.b16 %v2585
        %v2607 = vunpack.c.l.b16 %v2586
        %v2608 = vunpack.c.h.b16 %v2586
        %v2609 = vunpack.c.l.b16 %v2587
        %v2610 = vunpack.c.h.b16 %v2587
        %v2611 = vunpack.c.l.b16 %v2588
        %v2612 = vunpack.c.h.b16 %v2588
        %v2613 = vpack.c.b16 %v2597, %v2597
        %v2614 = vpack.c.b16 %v2598, %v2598
        %v2615 = vpack.c.b16 %v2599, %v2599
        %v2616 = vpack.c.b16 %v2600, %v2600
        %v2617 = vpack.c.b16 %v2601, %v2601
        %v2618 = vpack.c.b16 %v2602, %v2602
        %v2619 = vpack.c.b16 %v2603, %v2603
        %v2620 = vpack.c.b16 %v2604, %v2604
        %v2621 = vpack.c.b16 %v2605, %v2605
        %v2622 = vpack.c.b16 %v2606, %v2606
        %v2623 = vpack.c.b16 %v2607, %v2607
        %v2624 = vpack.c.b16 %v2608, %v2608
        %v2625 = vpack.c.b16 %v2609, %v2609
        %v2626 = vpack.c.b16 %v2610, %v2610
        %v2627 = vpack.c.b16 %v2611, %v2611
        %v2628 = vpack.c.b16 %v2612, %v2612
        %2645 = vst.msk [vmem:[%s424] sm:$0xf] %vm544, %v2613
        %2646 = vst.msk [vmem:[%s424 + $0x4] sm:$0xf] %vm544, %v2614
        %2647 = vst.msk [vmem:[%s424 + $0x8] sm:$0xf] %vm544, %v2615
        %2648 = vst.msk [vmem:[%s424 + $0xc] sm:$0xf] %vm544, %v2616
        %2649 = vst.msk [vmem:[%s424 + $0x10] sm:$0xf] %vm544, %v2617
        %2650 = vst.msk [vmem:[%s424 + $0x14] sm:$0xf] %vm544, %v2618
        %2651 = vst.msk [vmem:[%s424 + $0x18] sm:$0xf] %vm544, %v2619
        %2652 = vst.msk [vmem:[%s424 + $0x1c] sm:$0xf] %vm544, %v2620
        %2653 = vst.msk [vmem:[%s424 + $0x20] sm:$0xf] %vm544, %v2621
        %2654 = vst.msk [vmem:[%s424 + $0x24] sm:$0xf] %vm544, %v2622
        %2655 = vst.msk [vmem:[%s424 + $0x28] sm:$0xf] %vm544, %v2623
        %2656 = vst.msk [vmem:[%s424 + $0x2c] sm:$0xf] %vm544, %v2624
        %2657 = vst.msk [vmem:[%s424 + $0x30] sm:$0xf] %vm544, %v2625
        %2658 = vst.msk [vmem:[%s424 + $0x34] sm:$0xf] %vm544, %v2626
        %2659 = vst.msk [vmem:[%s424 + $0x38] sm:$0xf] %vm544, %v2627
        %2660 = vst.msk [vmem:[%s424 + $0x3c] sm:$0xf] %vm544, %v2628
        %s2661 = sand.u32 %s233, 1
        %s2662 = scalar_lea.sflag [#allocation5], %s2661
        %s2663 = sand.u32 %s233, 1
        %s2664 = smul.addr %s2663, 64
        %s2665 = scalar_lea.vmem [#allocation9], %s2664
        // Predicated region
        $region61: #{repdark_forward.1} parent=47 // pred_check
          %p2666 = pneg %p243
        $region62: #{repdark_forward.1} parent=47 // pred_check_branch
          %2668 = sbr.rel (%p2666) target = $region64
        $region63: #{repdark_forward.1} parent=47 // pred_region
          %s2669 = smul.u32 8, %s32
          %s2671 = ssub.s32 1024, 1024
          %2672 = vsyncadd %s2662, %s2671
          %s2673 = smul.addr %s2669, 2
          %s2674 = smul.addr %s31, 32
          %s2675 = sadd.s32 %s2673, %s2674
          %s2676 = smul.addr %s2675, 64
          %s2677 = scalar_lea.hbm %s7, %s2676
          %s2678 = sshll.u32 %s2665, 4
          %s2679 = int_to_ptr.vmem [resolvable:$true] %s2678
          %2684 = dma.vmem_to_hbm [thread:$0]  %s2679, 1024, %s2677, %s2662, 64, 64, 4
        $region64: #{repdark_forward.1} parent=47 // pred_fallthru
          _
      $region48: #{repdark_forward.1} parent=5 // pred_fallthru
        _
      %p2685 = scmp.le.s32.totalorder 2, %s22
      // Predicated region
      $region65: #{repdark_forward.1} parent=5 // pred_check
        %p2686 = pneg %p2685
      $region66: #{repdark_forward.1} parent=5 // pred_check_branch
        %2688 = sbr.rel (%p2686) target = $region68
      $region67: #{repdark_forward.1} parent=5 // pred_region
        %s2689 = ssub.s32 %s22, 2
        // Predicated region
        $region69: #{repdark_forward.1} parent=67 // pred_check
          %p2690 = pneg %p249
        $region70: #{repdark_forward.1} parent=67 // pred_check_branch
          %2692 = sbr.rel (%p2690) target = $region72
        $region71: #{repdark_forward.1} parent=67 // pred_region
          %s2693 = sand.u32 %s234, 1
          %s2694 = scalar_lea.sflag [#allocation5], %s2693
          %s2695 = sand.u32 %s234, 1
          %s2696 = smul.addr %s2695, 64
          %s2697 = scalar_lea.vmem [#allocation9], %s2696
          %2698 = dma.done %s2694, 1024
        $region72: #{repdark_forward.1} parent=67 // pred_fallthru
          _
      $region68: #{repdark_forward.1} parent=5 // pred_fallthru
        _
    $region6: #{repdark_forward.1} parent=1 // loop_footer
      %s26 = sadd.s32 1, %s22
    $region7: #{repdark_forward.1} parent=1 // loop_footer_branch
      %21 = sbr.rel target = $region3
    $region8: #{repdark_forward.1} parent=1 // loop_exit
      _
    %2699 = vsyncpa [#allocation4], 1
    %s2700 = scalar_lea.sflag [#allocation4], 1
    %2701 = vsyncpa %s2700, 1
    %2702 = vsyncpa [#allocation7], 1
    %s2703 = scalar_lea.sflag [#allocation7], 1
    %2704 = vsyncpa %s2703, 1
    %2705 = vsyncpa [#allocation5], 1
    %s2706 = scalar_lea.sflag [#allocation5], 1
    %2707 = vsyncpa %s2706, 1

</llo_original>
